<compile_context>
chip_gen: v6e
topology: v6e:2x2x1
jax: 0.10.0
libtpu: 0.0.40
codegen_flags: <defaults>
</compile_context>

<pallas_src>
import functools

import jax
import jax.numpy as jnp
import numpy as np
from jax import lax
from jax.experimental import pallas as pl
from jax.experimental.pallas import tpu as pltpu

BN_EPS = 1e-5


def _round_up(x, m):
    return ((x + m - 1) // m) * m


def _divisors_desc(n):
    return [d for d in range(n, 0, -1) if n % d == 0]


def _vmem_limit_bytes():
    cap = 64 * 1024 * 1024
    try:
        info = pltpu.get_tpu_info()
        cap = int(getattr(info, "vmem_capacity_bytes", cap) or cap)
    except Exception:
        pass
    return int(min(3 * cap // 4, 100 * 1024 * 1024))


def _pick_tr(nr, hw, budget_bytes):
    # Rows per stats tile: divisor of nr, multiple of 8 (or full), fits budget.
    def est(tr):
        return tr * _round_up(hw, 128) * 4 * 2
    ok = [d for d in _divisors_desc(nr) if d % 8 == 0 or d == nr]
    for d in ok:
        if est(d) <= budget_bytes:
            return d
    return ok[-1]


def _pick_tho(ho, wo, cin, budget_bytes):
    # Output rows per conv tile: divisor of Ho, (THo*Wo)%8==0 (or full Ho, which is
    # always BlockSpec-legal), fits the VMEM budget (double-buffered main block).
    def est(tho):
        return 2 * tho * _round_up(wo + 1, 8) * _round_up(2 * cin, 128) * 4 * 2
    ok = [d for d in _divisors_desc(ho) if (d * wo) % 8 == 0 or d == ho]
    for d in ok:
        if est(d) <= budget_bytes:
            return d
    return ok[-1]


# ---------------- Kernel 1: per-channel batch statistics ----------------

def _bn_stats_kernel(x_ref, sum_ref, sq_ref):
    # x_ref: (TR, H*W) rows of the NCHW tensor viewed as (N*C, H*W); one (n, c) per row.
    x = x_ref[...].astype(jnp.float32)
    sum_ref[...] = jnp.sum(x, axis=1, keepdims=True)
    sq_ref[...] = jnp.sum(x * x, axis=1, keepdims=True)


# -------- Kernel 2: fused BN-apply + ReLU + 3x3 stride-2 conv (packed-K matmul) -------

def _bn_conv_kernel(xm_ref, xh_ref, scale_ref, shift_ref, w_ref, b_ref, o_ref,
                    *, tho, wo, cin, hh, ww):
    # xm_ref : (1, 2, THo, Wo+1, 2*Cin)  parity-split padded rows i in [t*THo,(t+1)*THo)
    # xh_ref : (1, 1, 1,  Wo+1, 2*Cin)   halo: row-parity 0, i = (t+1)*THo
    # scale/shift: (1, 2*Cin) f32        w_ref: (9*Cin, Cout) bf16, K order (kh, kw, c)
    # b_ref  : (1, Cout) f32             o_ref: (1, THo*Wo, Cout)
    t = pl.program_id(1)
    scale = scale_ref[...]
    shift = shift_ref[...]

    # BN affine + ReLU (cast input to f32 once).
    x = xm_ref[0].astype(jnp.float32)                       # (2, THo, Wo+1, 2C)
    y = jnp.maximum(x * scale + shift, 0.0)
    xh = xh_ref[0, 0, 0].astype(jnp.float32)                # (Wo+1, 2C)
    yhr = jnp.maximum(xh * scale + shift, 0.0)

    # Conv zero-padding positions must contribute 0 *after* BN+ReLU.
    # Column validity: padded col w_pad = 2*jp + cp must lie in [1, W].  Small mask.
    jp = lax.broadcasted_iota(jnp.int32, (wo + 1, 2 * cin), 0)
    cp = (lax.broadcasted_iota(jnp.int32, (wo + 1, 2 * cin), 1) >= cin).astype(jnp.int32)
    wpad = 2 * jp + cp
    col_ok = (wpad >= 1) & (wpad <= ww)                     # (Wo+1, 2C)

    # Row validity: only the global top row (padded row 0) and the bottom halo row
    # (padded row 2*(t+1)*THo > H) can be padding.
    i_glob = lax.broadcasted_iota(jnp.int32, (tho, 1, 1), 0) + t * tho
    row0_ok = i_glob >= 1
    halo_ok = (2 * (t + 1) * tho) <= hh                     # scalar

    y0 = jnp.where(col_ok & row0_ok, y[0], 0.0)             # h_pad = 2*i      (kh = 0)
    y1 = jnp.where(col_ok, y[1], 0.0)                       # h_pad = 2*i + 1  (kh = 1)
    yh = jnp.where(col_ok & halo_ok, yhr, 0.0)
    if tho > 1:
        y2 = jnp.concatenate([y0[1:], yh[None]], axis=0)    # h_pad = 2*(i+1)  (kh = 2)
    else:
        y2 = yh[None]

    w = w_ref[...]
    bias = b_ref[...]

    if wo % 8 == 0:
        # Batched-M path: build the (THo*Wo, 9*Cin) patch with contiguous slices
        # (kw=0,1 is one 2C-wide slice; kw=2 is a C-wide slice shifted by one jp),
        # then a single MXU matmul per tile.
        pieces = []
        for s in (y0, y1, y2):
            pieces.append(s[:, :wo, :].reshape(tho * wo, 2 * cin))       # kw = 0, 1
            pieces.append(s[:, 1:wo + 1, :cin].reshape(tho * wo, cin))   # kw = 2
        patch = jnp.concatenate(pieces, axis=-1).astype(jnp.bfloat16)    # (THo*Wo, 9C)
        acc = jnp.dot(patch, w, preferred_element_type=jnp.float32)
        o_ref[0] = (acc + bias).astype(o_ref.dtype)
    else:
        # Fallback for Wo not a multiple of 8 (avoids a sublane-collapsing reshape):
        # per-output-row matmuls, still K-packed to 9*Cin.
        for il in range(tho):
            pieces = []
            for s in (y0, y1, y2):
                pieces.append(s[il, :wo, :])
                pieces.append(s[il, 1:wo + 1, :cin])
            patch = jnp.concatenate(pieces, axis=-1).astype(jnp.bfloat16)
            acc = jnp.dot(patch, w, preferred_element_type=jnp.float32)
            o_ref[0, il * wo:(il + 1) * wo, :] = (acc + bias).astype(o_ref.dtype)


# ---------------- wrapper ----------------

def downsampling_module(x_nchw, gamma, beta, conv_w, conv_b):
    N, C, H, W = x_nchw.shape
    Cout = conv_w.shape[0]
    Ho = (H - 1) // 2 + 1
    Wo = (W - 1) // 2 + 1

    vmem_limit = _vmem_limit_bytes()
    tile_budget = vmem_limit // 6

    # -------- pass 1: batch statistics straight from NCHW (no relayout, no pad) -----
    NR, HW = N * C, H * W
    x_rows = x_nchw.reshape(NR, HW)                         # free row-major view
    TR = _pick_tr(NR, HW, tile_budget)
    row_sum, row_sq = pl.pallas_call(
        _bn_stats_kernel,
        out_shape=(jax.ShapeDtypeStruct((NR, 1), jnp.float32),
                   jax.ShapeDtypeStruct((NR, 1), jnp.float32)),
        grid=(NR // TR,),
        in_specs=[pl.BlockSpec((TR, HW), lambda i: (i, 0))],
        out_specs=(pl.BlockSpec((TR, 1), lambda i: (i, 0)),
                   pl.BlockSpec((TR, 1), lambda i: (i, 0))),
        compiler_params=pltpu.CompilerParams(
            dimension_semantics=("parallel",),
            vmem_limit_bytes=vmem_limit),
    )(x_rows)

    m = N * H * W
    ch_sum = jnp.sum(row_sum.reshape(N, C), axis=0)
    ch_sq = jnp.sum(row_sq.reshape(N, C), axis=0)
    mean = ch_sum / m
    var = jnp.maximum(ch_sq / m - mean * mean, 0.0)         # biased (training-mode) var
    scale = gamma.astype(jnp.float32) * lax.rsqrt(var + BN_EPS)
    shift = beta.astype(jnp.float32) - mean * scale
    scale2 = jnp.tile(scale, 2).reshape(1, 2 * C)           # q = cp*C + c layout
    shift2 = jnp.tile(shift, 2).reshape(1, 2 * C)

    # -------- glue: ONE composed pad + parity-split + channels-last relayout --------
    # x_split[n, rp, i, jp, cp*C + c] = x_pad_nhwc[n, 2*i + rp, 2*jp + cp, c]
    ph = 2 * (Ho + 1) - 1 - H
    pw = 2 * (Wo + 1) - 1 - W
    xp = jnp.pad(x_nchw, ((0, 0), (0, 0), (1, ph), (1, pw)))
    x_split = (xp.reshape(N, C, Ho + 1, 2, Wo + 1, 2)
               .transpose(0, 3, 2, 4, 5, 1)
               .reshape(N, 2, Ho + 1, Wo + 1, 2 * C))
    # Pad values are irrelevant: the kernel zeroes conv-padding positions post-BN.

    # PyTorch (Cout, Cin, 3, 3) -> (3, 3, Cin, Cout) -> (9*Cin, Cout) bf16 MXU operand.
    w_packed = jnp.transpose(conv_w, (2, 3, 1, 0)).reshape(9 * C, Cout).astype(jnp.bfloat16)
    bias2 = conv_b.reshape(1, Cout).astype(jnp.float32)

    THo = _pick_tho(Ho, Wo, C, tile_budget)
    nT = Ho // THo

    kernel = functools.partial(_bn_conv_kernel, tho=THo, wo=Wo, cin=C, hh=H, ww=W)
    out_flat = pl.pallas_call(
        kernel,
        out_shape=jax.ShapeDtypeStruct((N, Ho * Wo, Cout), jnp.float32),
        grid=(N, nT),
        in_specs=[
            pl.BlockSpec((1, 2, THo, Wo + 1, 2 * C), lambda n, t: (n, 0, t, 0, 0)),
            pl.BlockSpec((1, 1, 1, Wo + 1, 2 * C),
                         lambda n, t, _T=THo: (n, 0, (t + 1) * _T, 0, 0)),
            pl.BlockSpec((1, 2 * C), lambda n, t: (0, 0)),
            pl.BlockSpec((1, 2 * C), lambda n, t: (0, 0)),
            pl.BlockSpec((9 * C, Cout), lambda n, t: (0, 0)),
            pl.BlockSpec((1, Cout), lambda n, t: (0, 0)),
        ],
        out_specs=pl.BlockSpec((1, THo * Wo, Cout), lambda n, t: (n, t, 0)),
        compiler_params=pltpu.CompilerParams(
            dimension_semantics=("parallel", "parallel"),
            vmem_limit_bytes=vmem_limit),
    )(x_split, x_split, scale2, shift2, w_packed, bias2)

    out = out_flat.reshape(N, Ho, Wo, Cout).transpose(0, 3, 1, 2)   # -> NCHW
    return out


# ---------------- pure-JAX reference (for correctness check) ----------------

def _reference(x, gamma, beta, w, b):
    mean = jnp.mean(x, axis=(0, 2, 3), keepdims=True)
    var = jnp.mean((x - mean) ** 2, axis=(0, 2, 3), keepdims=True)
    y = (x - mean) * lax.rsqrt(var + BN_EPS)
    y = y * gamma.reshape(1, -1, 1, 1) + beta.reshape(1, -1, 1, 1)
    y = jnp.maximum(y, 0.0)
    out = lax.conv_general_dilated(
        y, w, window_strides=(2, 2), padding=((1, 1), (1, 1)),
        dimension_numbers=("NCHW", "OIHW", "NCHW"))
    return out + b.reshape(1, -1, 1, 1)


if __name__ == "__main__":
    N, Cin, H, W = 2, 4, 16, 16
    Cout = 8

    key = jax.random.PRNGKey(0)
    kx, kg, kb, kw, kbias = jax.random.split(key, 5)

    x = jax.random.normal(kx, (N, Cin, H, W), dtype=jnp.float32)
    gamma = 1.0 + 0.1 * jax.random.normal(kg, (Cin,), dtype=jnp.float32)
    beta = 0.1 * jax.random.normal(kb, (Cin,), dtype=jnp.float32)
    conv_w = 0.1 * jax.random.normal(kw, (Cout, Cin, 3, 3), dtype=jnp.float32)
    conv_b = 0.1 * jax.random.normal(kbias, (Cout,), dtype=jnp.float32)

    fn = jax.jit(downsampling_module)
    out = jax.block_until_ready(fn(x, gamma, beta, conv_w, conv_b))

    ref = jax.block_until_ready(_reference(x, gamma, beta, conv_w, conv_b))
    assert out.shape == (N, Cout, (H - 1) // 2 + 1, (W - 1) // 2 + 1), out.shape
    # MXU operands are bf16 (f32 accumulation), so compare at bf16-level tolerance.
    np.testing.assert_allclose(np.asarray(out), np.asarray(ref), rtol=2e-2, atol=2e-2)

    print("KERNEL_OK")
</pallas_src>

<mosaic_0001>
module attributes {stable_mosaic.version = 11 : i64} {
  func.func @_bn_stats_kernel(%arg0: i32, %arg1: memref<8x256xf32, #tpu.memory_space<vmem>>, %arg2: memref<8x1xf32, #tpu.memory_space<vmem>>, %arg3: memref<8x1xf32, #tpu.memory_space<vmem>>) attributes {dimension_semantics = [#tpu.dimension_semantics<parallel>], iteration_bounds = array<i64: 1>, scalar_prefetch = 0 : i64, scratch_operands = 0 : i64, tpu.core_type = #tpu.core_type<tc>, window_params = [{transform_indices = @transform_0, window_bounds = array<i64: 8, 256>}, {transform_indices = @transform_1, window_bounds = array<i64: 8, 1>}, {transform_indices = @transform_2, window_bounds = array<i64: 8, 1>}]} {
    %c0 = arith.constant 0 : index
    %c0_0 = arith.constant 0 : index
    %0 = vector.load %arg1[%c0, %c0_0] : memref<8x256xf32, #tpu.memory_space<vmem>>, vector<8x256xf32>
    %cst = arith.constant dense<0.000000e+00> : vector<8xf32>
    %1 = vector.multi_reduction <add>, %0, %cst [1] : vector<8x256xf32> to vector<8xf32>
    %2 = vector.shape_cast %1 : vector<8xf32> to vector<8x1xf32>
    %c0_1 = arith.constant 0 : index
    %c0_2 = arith.constant 0 : index
    %3 = vector.load %arg2[%c0_1, %c0_2] : memref<8x1xf32, #tpu.memory_space<vmem>>, vector<8x1xf32>
    tpu.vector_store %arg2[%c0_1, %c0_2], %2 {strides = array<i32>} : memref<8x1xf32, #tpu.memory_space<vmem>>, vector<8x1xf32>,
    %4 = arith.mulf %0, %0 : vector<8x256xf32>
    %cst_3 = arith.constant dense<0.000000e+00> : vector<8xf32>
    %5 = vector.multi_reduction <add>, %4, %cst_3 [1] : vector<8x256xf32> to vector<8xf32>
    %6 = vector.shape_cast %5 : vector<8xf32> to vector<8x1xf32>
    %c0_4 = arith.constant 0 : index
    %c0_5 = arith.constant 0 : index
    %7 = vector.load %arg3[%c0_4, %c0_5] : memref<8x1xf32, #tpu.memory_space<vmem>>, vector<8x1xf32>
    tpu.vector_store %arg3[%c0_4, %c0_5], %6 {strides = array<i32>} : memref<8x1xf32, #tpu.memory_space<vmem>>, vector<8x1xf32>,
    return
  }
  func.func @transform_0(%arg0: i32) -> (i32, i32) {
    %c0_i32 = arith.constant 0 : i32
    %c0_i32_0 = arith.constant 0 : i32
    return %arg0, %c0_i32 : i32, i32
  }
  func.func @transform_1(%arg0: i32) -> (i32, i32) {
    %c0_i32 = arith.constant 0 : i32
    %c0_i32_0 = arith.constant 0 : i32
    return %arg0, %c0_i32 : i32, i32
  }
  func.func @transform_2(%arg0: i32) -> (i32, i32) {
    %c0_i32 = arith.constant 0 : i32
    %c0_i32_0 = arith.constant 0 : i32
    return %arg0, %c0_i32 : i32, i32
  }
}

module attributes {stable_mosaic.version = 11 : i64} {
  func.func @_bn_conv_kernel(%arg0: i32, %arg1: i32, %arg2: memref<1x2x8x9x8xf32, #tpu.memory_space<vmem>>, %arg3: memref<1x1x1x9x8xf32, #tpu.memory_space<vmem>>, %arg4: memref<1x8xf32, #tpu.memory_space<vmem>>, %arg5: memref<1x8xf32, #tpu.memory_space<vmem>>, %arg6: memref<36x8xbf16, #tpu.memory_space<vmem>>, %arg7: memref<1x8xf32, #tpu.memory_space<vmem>>, %arg8: memref<1x64x8xf32, #tpu.memory_space<vmem>>) attributes {dimension_semantics = [#tpu.dimension_semantics<parallel>, #tpu.dimension_semantics<parallel>], iteration_bounds = array<i64: 2, 1>, scalar_prefetch = 0 : i64, scratch_operands = 0 : i64, tpu.core_type = #tpu.core_type<tc>, window_params = [{transform_indices = @transform_0, window_bounds = array<i64: 1, 2, 8, 9, 8>}, {transform_indices = @transform_1, window_bounds = array<i64: 1, 1, 1, 9, 8>}, {pipeline_mode = #tpu.pipeline_mode<synchronous>, transform_indices = @transform_2, window_bounds = array<i64: 1, 8>}, {pipeline_mode = #tpu.pipeline_mode<synchronous>, transform_indices = @transform_3, window_bounds = array<i64: 1, 8>}, {pipeline_mode = #tpu.pipeline_mode<synchronous>, transform_indices = @transform_4, window_bounds = array<i64: 36, 8>}, {pipeline_mode = #tpu.pipeline_mode<synchronous>, transform_indices = @transform_5, window_bounds = array<i64: 1, 8>}, {transform_indices = @transform_6, window_bounds = array<i64: 1, 64, 8>}]} {
    %c0 = arith.constant 0 : index
    %c0_0 = arith.constant 0 : index
    %0 = vector.load %arg4[%c0, %c0_0] : memref<1x8xf32, #tpu.memory_space<vmem>>, vector<1x8xf32>
    %c0_1 = arith.constant 0 : index
    %c0_2 = arith.constant 0 : index
    %1 = vector.load %arg5[%c0_1, %c0_2] : memref<1x8xf32, #tpu.memory_space<vmem>>, vector<1x8xf32>
    %c0_3 = arith.constant 0 : index
    %c0_4 = arith.constant 0 : index
    %c0_5 = arith.constant 0 : index
    %c0_6 = arith.constant 0 : index
    %c0_7 = arith.constant 0 : index
    %2 = vector.load %arg2[%c0_3, %c0_4, %c0_5, %c0_6, %c0_7] : memref<1x2x8x9x8xf32, #tpu.memory_space<vmem>>, vector<1x2x8x9x8xf32>
    %3 = vector.shape_cast %2 : vector<1x2x8x9x8xf32> to vector<2x8x9x8xf32>
    %4 = vector.shape_cast %0 : vector<1x8xf32> to vector<1x1x1x8xf32>
    %5 = vector.broadcast %4 : vector<1x1x1x8xf32> to vector<2x8x9x8xf32>
    %6 = arith.mulf %3, %5 : vector<2x8x9x8xf32>
    %7 = vector.shape_cast %1 : vector<1x8xf32> to vector<1x1x1x8xf32>
    %8 = vector.broadcast %7 : vector<1x1x1x8xf32> to vector<2x8x9x8xf32>
    %9 = arith.addf %6, %8 : vector<2x8x9x8xf32>
    %cst = arith.constant 0.000000e+00 : f32
    %10 = vector.broadcast %cst : f32 to vector<2x8x9x8xf32>
    %11 = arith.maximumf %9, %10 : vector<2x8x9x8xf32>
    %c0_8 = arith.constant 0 : index
    %c0_9 = arith.constant 0 : index
    %c0_10 = arith.constant 0 : index
    %c0_11 = arith.constant 0 : index
    %c0_12 = arith.constant 0 : index
    %12 = vector.load %arg3[%c0_8, %c0_9, %c0_10, %c0_11, %c0_12] : memref<1x1x1x9x8xf32, #tpu.memory_space<vmem>>, vector<1x1x1x9x8xf32>
    %13 = vector.shape_cast %12 : vector<1x1x1x9x8xf32> to vector<9x8xf32>
    %14 = vector.broadcast %0 : vector<1x8xf32> to vector<9x8xf32>
    %15 = arith.mulf %13, %14 : vector<9x8xf32>
    %16 = vector.broadcast %1 : vector<1x8xf32> to vector<9x8xf32>
    %17 = arith.addf %15, %16 : vector<9x8xf32>
    %cst_13 = arith.constant 0.000000e+00 : f32
    %18 = vector.broadcast %cst_13 : f32 to vector<9x8xf32>
    %19 = arith.maximumf %17, %18 : vector<9x8xf32>
    %20 = tpu.iota {dimensions = array<i32: 0>} : vector<9x8xi32>
    %21 = tpu.iota {dimensions = array<i32: 1>} : vector<9x8xi32>
    %c4_i32 = arith.constant 4 : i32
    %22 = vector.broadcast %c4_i32 : i32 to vector<9x8xi32>
    %23 = arith.cmpi sge, %21, %22 : vector<9x8xi32>
    %24 = arith.extui %23 : vector<9x8xi1> to vector<9x8xi32>
    %c2_i32 = arith.constant 2 : i32
    %25 = vector.broadcast %c2_i32 : i32 to vector<9x8xi32>
    %26 = arith.muli %25, %20 : vector<9x8xi32>
    %27 = arith.addi %26, %24 : vector<9x8xi32>
    %c1_i32 = arith.constant 1 : i32
    %28 = vector.broadcast %c1_i32 : i32 to vector<9x8xi32>
    %29 = arith.cmpi sge, %27, %28 : vector<9x8xi32>
    %c16_i32 = arith.constant 16 : i32
    %30 = vector.broadcast %c16_i32 : i32 to vector<9x8xi32>
    %31 = arith.cmpi sle, %27, %30 : vector<9x8xi32>
    %32 = arith.andi %29, %31 : vector<9x8xi1>
    %33 = tpu.iota {dimensions = array<i32: 0>} : vector<8x1x1xi32>
    %c8_i32 = arith.constant 8 : i32
    %34 = arith.muli %arg1, %c8_i32 : i32
    %35 = vector.broadcast %34 : i32 to vector<8x1x1xi32>
    %36 = arith.addi %33, %35 : vector<8x1x1xi32>
    %c1_i32_14 = arith.constant 1 : i32
    %37 = vector.broadcast %c1_i32_14 : i32 to vector<8x1x1xi32>
    %38 = arith.cmpi sge, %36, %37 : vector<8x1x1xi32>
    %c1_i32_15 = arith.constant 1 : i32
    %39 = arith.addi %arg1, %c1_i32_15 : i32
    %c2_i32_16 = arith.constant 2 : i32
    %40 = arith.muli %c2_i32_16, %39 : i32
    %c8_i32_17 = arith.constant 8 : i32
    %41 = arith.muli %40, %c8_i32_17 : i32
    %c16_i32_18 = arith.constant 16 : i32
    %42 = arith.cmpi sle, %41, %c16_i32_18 : i32
    %43 = vector.shape_cast %32 : vector<9x8xi1> to vector<1x9x8xi1>
    %44 = vector.broadcast %43 : vector<1x9x8xi1> to vector<8x9x8xi1>
    %45 = vector.broadcast %38 : vector<8x1x1xi1> to vector<8x9x8xi1>
    %46 = arith.andi %44, %45 : vector<8x9x8xi1>
    %47 = vector.extract_strided_slice %11 {offsets = [0, 0, 0, 0], sizes = [1, 8, 9, 8], strides = [1, 1, 1, 1]} : vector<2x8x9x8xf32> to vector<1x8x9x8xf32>
    %48 = vector.shape_cast %47 : vector<1x8x9x8xf32> to vector<8x9x8xf32>
    %cst_19 = arith.constant 0.000000e+00 : f32
    %49 = vector.broadcast %cst_19 : f32 to vector<8x9x8xf32>
    %50 = arith.select %46, %48, %49 : vector<8x9x8xi1>, vector<8x9x8xf32>
    %51 = vector.extract_strided_slice %11 {offsets = [1, 0, 0, 0], sizes = [1, 8, 9, 8], strides = [1, 1, 1, 1]} : vector<2x8x9x8xf32> to vector<1x8x9x8xf32>
    %52 = vector.shape_cast %51 : vector<1x8x9x8xf32> to vector<8x9x8xf32>
    %cst_20 = arith.constant 0.000000e+00 : f32
    %53 = vector.shape_cast %32 : vector<9x8xi1> to vector<1x9x8xi1>
    %54 = vector.broadcast %53 : vector<1x9x8xi1> to vector<8x9x8xi1>
    %55 = vector.broadcast %cst_20 : f32 to vector<8x9x8xf32>
    %56 = arith.select %54, %52, %55 : vector<8x9x8xi1>, vector<8x9x8xf32>
    %57 = vector.broadcast %42 : i1 to vector<9x8xi1>
    %58 = arith.andi %32, %57 : vector<9x8xi1>
    %cst_21 = arith.constant 0.000000e+00 : f32
    %59 = vector.broadcast %cst_21 : f32 to vector<9x8xf32>
    %60 = arith.select %58, %19, %59 : vector<9x8xi1>, vector<9x8xf32>
    %61 = vector.extract_strided_slice %50 {offsets = [1, 0, 0], sizes = [7, 9, 8], strides = [1, 1, 1]} : vector<8x9x8xf32> to vector<7x9x8xf32>
    %62 = vector.shape_cast %60 : vector<9x8xf32> to vector<1x9x8xf32>
    %63 = tpu.concatenate %61, %62 in 0 : vector<7x9x8xf32>, vector<1x9x8xf32> -> vector<8x9x8xf32>
    %c0_22 = arith.constant 0 : index
    %c0_23 = arith.constant 0 : index
    %64 = vector.load %arg6[%c0_22, %c0_23] : memref<36x8xbf16, #tpu.memory_space<vmem>>, vector<36x8xbf16>
    %c0_24 = arith.constant 0 : index
    %c0_25 = arith.constant 0 : index
    %65 = vector.load %arg7[%c0_24, %c0_25] : memref<1x8xf32, #tpu.memory_space<vmem>>, vector<1x8xf32>
    %66 = vector.extract_strided_slice %50 {offsets = [0, 0, 0], sizes = [8, 8, 8], strides = [1, 1, 1]} : vector<8x9x8xf32> to vector<8x8x8xf32>
    %67 = vector.shape_cast %66 : vector<8x8x8xf32> to vector<64x8xf32>
    %68 = vector.extract_strided_slice %50 {offsets = [0, 1, 0], sizes = [8, 8, 4], strides = [1, 1, 1]} : vector<8x9x8xf32> to vector<8x8x4xf32>
    %69 = vector.shape_cast %68 : vector<8x8x4xf32> to vector<64x4xf32>
    %70 = vector.extract_strided_slice %56 {offsets = [0, 0, 0], sizes = [8, 8, 8], strides = [1, 1, 1]} : vector<8x9x8xf32> to vector<8x8x8xf32>
    %71 = vector.shape_cast %70 : vector<8x8x8xf32> to vector<64x8xf32>
    %72 = vector.extract_strided_slice %56 {offsets = [0, 1, 0], sizes = [8, 8, 4], strides = [1, 1, 1]} : vector<8x9x8xf32> to vector<8x8x4xf32>
    %73 = vector.shape_cast %72 : vector<8x8x4xf32> to vector<64x4xf32>
    %74 = vector.extract_strided_slice %63 {offsets = [0, 0, 0], sizes = [8, 8, 8], strides = [1, 1, 1]} : vector<8x9x8xf32> to vector<8x8x8xf32>
    %75 = vector.shape_cast %74 : vector<8x8x8xf32> to vector<64x8xf32>
    %76 = vector.extract_strided_slice %63 {offsets = [0, 1, 0], sizes = [8, 8, 4], strides = [1, 1, 1]} : vector<8x9x8xf32> to vector<8x8x4xf32>
    %77 = vector.shape_cast %76 : vector<8x8x4xf32> to vector<64x4xf32>
    %78 = tpu.concatenate %67, %69, %71, %73, %75, %77 in 1 : vector<64x8xf32>, vector<64x4xf32>, vector<64x8xf32>, vector<64x4xf32>, vector<64x8xf32>, vector<64x4xf32> -> vector<64x36xf32>
    %79 = arith.truncf %78 : vector<64x36xf32> to vector<64x36xbf16>
    %cst_26 = arith.constant dense<0.000000e+00> : vector<64x8xf32>
    %80 = tpu.matmul %79, %64, %cst_26 {dimension_numbers = #tpu.dot_dimension_numbers<[1], [0], [0], [1], [0, 0, 1, 1], [], []>} : vector<64x36xbf16>, vector<36x8xbf16>, vector<64x8xf32> -> vector<64x8xf32>
    %81 = vector.broadcast %65 : vector<1x8xf32> to vector<64x8xf32>
    %82 = arith.addf %80, %81 : vector<64x8xf32>
    %c0_27 = arith.constant 0 : index
    %c0_28 = arith.constant 0 : index
    %c0_29 = arith.constant 0 : index
    %83 = vector.load %arg8[%c0_27, %c0_28, %c0_29] : memref<1x64x8xf32, #tpu.memory_space<vmem>>, vector<1x64x8xf32>
    %84 = vector.shape_cast %83 : vector<1x64x8xf32> to vector<64x8xf32>
    %85 = vector.shape_cast %82 : vector<64x8xf32> to vector<1x64x8xf32>
    tpu.vector_store %arg8[%c0_27, %c0_28, %c0_29], %85 {strides = array<i32>} : memref<1x64x8xf32, #tpu.memory_space<vmem>>, vector<1x64x8xf32>,
    return
  }
  func.func @transform_0(%arg0: i32, %arg1: i32) -> (i32, i32, i32, i32, i32) {
    %c0_i32 = arith.constant 0 : i32
    %c0_i32_0 = arith.constant 0 : i32
    %c0_i32_1 = arith.constant 0 : i32
    %c0_i32_2 = arith.constant 0 : i32
    return %arg0, %c0_i32, %arg1, %c0_i32_0, %c0_i32_1 : i32, i32, i32, i32, i32
  }
  func.func @transform_1(%arg0: i32, %arg1: i32) -> (i32, i32, i32, i32, i32) {
    %c1_i32 = arith.constant 1 : i32
    %0 = arith.addi %arg1, %c1_i32 : i32
    %c8_i32 = arith.constant 8 : i32
    %1 = arith.muli %0, %c8_i32 : i32
    %c0_i32 = arith.constant 0 : i32
    %c0_i32_0 = arith.constant 0 : i32
    %c0_i32_1 = arith.constant 0 : i32
    %c0_i32_2 = arith.constant 0 : i32
    return %arg0, %c0_i32, %1, %c0_i32_0, %c0_i32_1 : i32, i32, i32, i32, i32
  }
  func.func @transform_2(%arg0: i32, %arg1: i32) -> (i32, i32) {
    %c0_i32 = arith.constant 0 : i32
    %c0_i32_0 = arith.constant 0 : i32
    %c0_i32_1 = arith.constant 0 : i32
    return %c0_i32, %c0_i32_0 : i32, i32
  }
  func.func @transform_3(%arg0: i32, %arg1: i32) -> (i32, i32) {
    %c0_i32 = arith.constant 0 : i32
    %c0_i32_0 = arith.constant 0 : i32
    %c0_i32_1 = arith.constant 0 : i32
    return %c0_i32, %c0_i32_0 : i32, i32
  }
  func.func @transform_4(%arg0: i32, %arg1: i32) -> (i32, i32) {
    %c0_i32 = arith.constant 0 : i32
    %c0_i32_0 = arith.constant 0 : i32
    %c0_i32_1 = arith.constant 0 : i32
    return %c0_i32, %c0_i32_0 : i32, i32
  }
  func.func @transform_5(%arg0: i32, %arg1: i32) -> (i32, i32) {
    %c0_i32 = arith.constant 0 : i32
    %c0_i32_0 = arith.constant 0 : i32
    %c0_i32_1 = arith.constant 0 : i32
    return %c0_i32, %c0_i32_0 : i32, i32
  }
  func.func @transform_6(%arg0: i32, %arg1: i32) -> (i32, i32, i32) {
    %c0_i32 = arith.constant 0 : i32
    %c0_i32_0 = arith.constant 0 : i32
    return %arg0, %arg1, %c0_i32 : i32, i32, i32
  }
}

</mosaic_0001>

<llo_original>
// kernel: tile.13
$region0: #{tile.13}
  #allocation0 [shape = 's32[1]{0}', space=sflag, size = 0x4, scoped, tag = 'scoped memory for tile.13']
  %s0 = inlined_call_operand.vmem [shape: f32[4], index: 0, kind: input, shape index: {}]
  %s1 = inlined_call_operand.vmem [shape: f32[2,4], index: 1, kind: output, shape index: {}]
  // Predicated region
  $region2: #{tile.13} parent=0 // pred_check
    _
  $region3: #{tile.13} parent=0 // pred_check_branch
    %3 = sbr.rel (0) target = $region5
  $region4: #{tile.13} parent=0 // pred_region
    _
  $region5: #{tile.13} parent=0 // pred_fallthru
    _
  %v4 = vld [vmem:[%s0] ss:$0 sm:$0xff]
  %5 = vst [vmem:[%s1] sm:$0x3] %v4

// kernel: tile.14
$region0: #{tile.14}
  %s0 = inlined_call_operand.vmem [shape: f32[2,4], index: 0, kind: input, shape index: {}]
  %s1 = inlined_call_operand.vmem [shape: f32[1,8], index: 1, kind: output, shape index: {}]
  $region1: #{tile.14} parent=0
    #allocation0 [shape = 'u8[4096]{0}', space=vmem, size = 0x1000, scoped, tag = 'scoped mem for output reshape']
    #allocation1 [shape = 'u8[4096]{0}', space=vmem, size = 0x1000, scoped, tag = 'scoped mem for input reshape']
    %s3 = sshll.u32 1, 2
    %s4 = ssub.s32 %s3, 1
    %v5 = vld [vmem:[%s0] sm:%s4]
    %6 = vst [vmem:[#allocation1] sm:%s4] %v5
    %v7 = vld [vmem:[#allocation1] sm:$0x1]
    %vm8 = vcmask 31744
    %9 = vst.msk [vmem:[#allocation0] sm:$0x1] %vm8, %v7
    %s10 = scalar_lea.vmem [#allocation1], 1
    %v11 = vld [vmem:[%s10] sm:$0x1]
    %12 = vrot.lane.b32.xlu0 %v11, 4
    %v13 = vpop.permute.xlu0 %12
    %vm14 = vcmask 64544
    %15 = vst.msk [vmem:[#allocation0] sm:$0x1] %vm14, %v13
    %s17 = sshll.u32 1, 1
    %s18 = ssub.s32 %s17, 1
    %v20 = vld [vmem:[#allocation0] sm:%s18]
    %s21 = sshll.u32 1, 1
    %s22 = ssub.s32 %s21, 1
    %23 = vst [vmem:[%s1] sm:%s22] %v20

// kernel: downsampling_module.2
$region0: #{downsampling_module.2}
  #allocation0 [shape = 'u32[]', space=smem, size = 0x4, offset = 0x4, fixed_abs, tag = 'smem constant byte address 0x4 - core index']
  #allocation1 [shape = 'u32[144,128]{1,0:T(1,128)}', space=vmem, size = 0x12000, scoped, tag = 'internal scratch']
  %s0 = inlined_call_operand.vmem [shape: f32[8,256], index: 0, kind: input, shape index: {}]
  %s1 = inlined_call_operand.vmem [shape: f32[8,1], index: 1, kind: output, shape index: {0}]
  %s2 = inlined_call_operand.vmem [shape: f32[8,1], index: 2, kind: output, shape index: {1}]
  %3 = xla_tuple %s1, %s2
  %s4 = sld [smem:[#allocation0]]
  $region22: #{downsampling_module.2} parent=0
    _
  %s6 = ssub.s32 1, %s4
  %s7 = scalar_select 0, %s6, %s4
  // Predicated region
  $region2: #{downsampling_module.2} parent=0 // pred_check
    _
  $region3: #{downsampling_module.2} parent=0 // pred_check_branch
    %9 = sbr.rel (0) target = $region5
  $region4: #{downsampling_module.2} parent=0 // pred_region
    _
  $region5: #{downsampling_module.2} parent=0 // pred_fallthru
    _
  %v10 = vld [vmem:[%s0] sm:$0xff]
  %v11 = vld [vmem:[%s0 + $0x8] sm:$0xff]
  %v12 = vadd.f32 %v10, %v11
  %13 = vadd.xlane.f32.xlu0 %v12
  %v14 = vpop.xlane.xlu0 %13
  %vm15 = vcmask 7168
  %16 = vst.msk [vmem:[%s1] sm:$0xff] %vm15, %v14
  %v17 = vmul.f32 %v10, %v10
  %v18 = vmul.f32 %v11, %v11
  %v19 = vadd.f32 %v17, %v18
  %20 = vadd.xlane.f32.xlu0 %v19
  %v21 = vpop.xlane.xlu0 %20
  %22 = vst.msk [vmem:[%s2] sm:$0xff] %vm15, %v21
  // Predicated region
  $region6: #{downsampling_module.2} parent=0 // pred_check
    _
  $region7: #{downsampling_module.2} parent=0 // pred_check_branch
    %24 = sbr.rel (0) target = $region9
  $region8: #{downsampling_module.2} parent=0 // pred_region
    _
  $region9: #{downsampling_module.2} parent=0 // pred_fallthru
    _
  // Predicated region
  $region10: #{downsampling_module.2} parent=0 // pred_check
    _
  $region11: #{downsampling_module.2} parent=0 // pred_check_branch
    %26 = sbr.rel (0) target = $region13
  $region12: #{downsampling_module.2} parent=0 // pred_region
    _
  $region13: #{downsampling_module.2} parent=0 // pred_fallthru
    _
  // Predicated region
  $region14: #{downsampling_module.2} parent=0 // pred_check
    _
  $region15: #{downsampling_module.2} parent=0 // pred_check_branch
    %28 = sbr.rel (0) target = $region17
  $region16: #{downsampling_module.2} parent=0 // pred_region
    _
  $region17: #{downsampling_module.2} parent=0 // pred_fallthru
    _
  // Predicated region
  $region18: #{downsampling_module.2} parent=0 // pred_check
    _
  $region19: #{downsampling_module.2} parent=0 // pred_check_branch
    %30 = sbr.rel (0) target = $region21
  $region20: #{downsampling_module.2} parent=0 // pred_region
    _
  $region21: #{downsampling_module.2} parent=0 // pred_fallthru
    _

// kernel: downsampling_module.3
$region0: #{downsampling_module.3}
  #allocation0 [shape = 'u32[]', space=smem, size = 0x4, offset = 0x4, fixed_abs, tag = 'smem constant byte address 0x4 - core index']
  #allocation1 [shape = 'u32[144,128]{1,0:T(1,128)}', space=vmem, size = 0x12000, scoped, tag = 'internal scratch']
  %s0 = inlined_call_operand.vmem [shape: f32[2,2,9,9,8], index: 0, kind: input, shape index: {}, may-alias: {0,1}]
  %s1 = inlined_call_operand.vmem [shape: f32[2,2,9,9,8], index: 1, kind: input, shape index: {}, may-alias: {0,1}]
  %s2 = inlined_call_operand.vmem [shape: f32[1,8], index: 2, kind: input, shape index: {}]
  %s3 = inlined_call_operand.vmem [shape: f32[1,8], index: 3, kind: input, shape index: {}]
  %s4 = inlined_call_operand.vmem [shape: bf16[36,8], index: 4, kind: input, shape index: {}]
  %s5 = inlined_call_operand.vmem [shape: f32[1,8], index: 5, kind: input, shape index: {}]
  %s6 = inlined_call_operand.vmem [shape: f32[2,64,8], index: 6, kind: output, shape index: {}]
  %s7 = sld [smem:[#allocation0]]
  $region109: #{downsampling_module.3} parent=0
    _
  %s9 = ssub.s32 1, %s7
  %s10 = scalar_select 0, %s9, %s7
  $region1: #{downsampling_module.3} parent=0
    #allocation2 [shape = 'u8[262144]{0}', space=vmem, size = 0x40000, scoped, tag = 'input window, operand 0']
    loop: start=0, step=1, limit=4
    $region2: #{downsampling_module.3} parent=1 // loop_pre_header
      _
    $region3: #{downsampling_module.3} parent=1 // loop_header
      %s12 = sphi 0, %s16
      %p13 = scmp.ge.s32.totalorder %s12, 4
      %s19 = sphi 0, %s31
      %s20 = sphi 0, %s27
      %s21 = sphi 0, %s19
      %s22 = sphi 0, %s20
      %s23 = sphi 0, %s21
      %s24 = sphi 0, %s22
      %s36 = sphi 0, %s38
      %s39 = sphi 0, %s36
      %s40 = sphi 0, %s39
      %s56 = sphi 0, %s40
      %s68 = sphi 0, %s70
      %s71 = sphi 0, %s68
      %s72 = sphi 0, %s71
      %s88 = sphi 0, %s72
      %s92 = sphi 0, %s92
      %s94 = sphi 0, %s92
      %s95 = sphi 0, %s94
      %s109 = sphi 0, %s95
      %s113 = sphi 0, %s113
      %s115 = sphi 0, %s113
      %s116 = sphi 0, %s115
      %s130 = sphi 0, %s116
      %s134 = sphi 0, %s134
      %s136 = sphi 0, %s134
      %s137 = sphi 0, %s136
      %s151 = sphi 0, %s137
      %s155 = sphi 0, %s155
      %s157 = sphi 0, %s155
      %s158 = sphi 0, %s157
      %s172 = sphi 0, %s158
      %s180 = sphi 0, %s182
      %s183 = sphi 0, %s180
      %s184 = sphi 0, %s183
      %s200 = sphi 0, %s184
    $region4: #{downsampling_module.3} parent=1 // loop_header_branch
      %15 = sbr.rel (%p13) target = $region8
    $region5: #{downsampling_module.3} parent=1 // loop_body
      %s17 = ssub.s32 %s12, 1
      %s18 = ssub.s32 %s12, 2
      %s25 = sadd.s32 1, %s20
      %p26 = scmp.ge.s32.totalorder %s25, 1
      %s27 = scalar_select %p26, 0, %s25
      %s28 = sadd.s32 1, %s19
      %s29 = scalar_select %p26, %s28, %s19
      %p30 = scmp.ge.s32.totalorder %s29, 2
      %s31 = scalar_select %p30, 0, %s29
      %s32 = ssub.s32 %s19, %s31
      %s33 = ssub.s32 %s20, %s27
      %s34 = sor.u32 %s32, %s33
      %p35 = scmp.eq.s32.totalorder %s34, 0
      %s37 = sadd.s32 %s36, 1
      %s38 = scalar_select %p35, %s36, %s37
      %p41 = pneg %p35
      %p42 = scmp.eq.s32.totalorder %s12, 1
      %p43 = por %p41, %p42
      %p44 = scmp.ne.s32.totalorder %s36, %s39
      %p45 = scmp.eq.s32.totalorder %s12, 0
      %p46 = por %p44, %p45
      %p47 = scmp.ne.s32.totalorder %s36, %s39
      %p48 = scmp.eq.s32.totalorder %s17, 1
      %p49 = por %p47, %p48
      %p50 = scmp.ne.s32.totalorder %s39, %s40
      %p51 = scmp.eq.s32.totalorder %s17, 0
      %p52 = por %p50, %p51
      %p53 = scmp.ne.s32.totalorder %s39, %s40
      %p54 = scmp.eq.s32.totalorder %s18, 1
      %p55 = por %p53, %p54
      %p57 = scmp.ne.s32.totalorder %s40, %s56
      %p58 = scmp.eq.s32.totalorder %s18, 0
      %p59 = por %p57, %p58
      %s60 = sadd.s32 %s20, 1
      %s61 = smul.u32 %s60, 8
      %s62 = sadd.s32 %s27, 1
      %s63 = smul.u32 %s62, 8
      %s64 = ssub.s32 %s19, %s31
      %s65 = ssub.s32 %s61, %s63
      %s66 = sor.u32 %s64, %s65
      %p67 = scmp.eq.s32.totalorder %s66, 0
      %s69 = sadd.s32 %s68, 1
      %s70 = scalar_select %p67, %s68, %s69
      %p73 = pneg %p67
      %p74 = scmp.eq.s32.totalorder %s12, 1
      %p75 = por %p73, %p74
      %p76 = scmp.ne.s32.totalorder %s68, %s71
      %p77 = scmp.eq.s32.totalorder %s12, 0
      %p78 = por %p76, %p77
      %p79 = scmp.ne.s32.totalorder %s68, %s71
      %p80 = scmp.eq.s32.totalorder %s17, 1
      %p81 = por %p79, %p80
      %p82 = scmp.ne.s32.totalorder %s71, %s72
      %p83 = scmp.eq.s32.totalorder %s17, 0
      %p84 = por %p82, %p83
      %p85 = scmp.ne.s32.totalorder %s71, %s72
      %p86 = scmp.eq.s32.totalorder %s18, 1
      %p87 = por %p85, %p86
      %p89 = scmp.ne.s32.totalorder %s72, %s88
      %p90 = scmp.eq.s32.totalorder %s18, 0
      %p91 = por %p89, %p90
      %s93 = sadd.s32 %s92, 1
      %p96 = scmp.eq.s32.totalorder %s12, 1
      %p97 = scmp.ne.s32.totalorder %s92, %s94
      %p98 = scmp.eq.s32.totalorder %s12, 0
      %p99 = por %p97, %p98
      %p100 = scmp.ne.s32.totalorder %s92, %s94
      %p101 = scmp.eq.s32.totalorder %s17, 1
      %p102 = por %p100, %p101
      %p103 = scmp.ne.s32.totalorder %s94, %s95
      %p104 = scmp.eq.s32.totalorder %s17, 0
      %p105 = por %p103, %p104
      %p106 = scmp.ne.s32.totalorder %s94, %s95
      %p107 = scmp.eq.s32.totalorder %s18, 1
      %p108 = por %p106, %p107
      %p110 = scmp.ne.s32.totalorder %s95, %s109
      %p111 = scmp.eq.s32.totalorder %s18, 0
      %p112 = por %p110, %p111
      %s114 = sadd.s32 %s113, 1
      %p117 = scmp.eq.s32.totalorder %s12, 1
      %p118 = scmp.ne.s32.totalorder %s113, %s115
      %p119 = scmp.eq.s32.totalorder %s12, 0
      %p120 = por %p118, %p119
      %p121 = scmp.ne.s32.totalorder %s113, %s115
      %p122 = scmp.eq.s32.totalorder %s17, 1
      %p123 = por %p121, %p122
      %p124 = scmp.ne.s32.totalorder %s115, %s116
      %p125 = scmp.eq.s32.totalorder %s17, 0
      %p126 = por %p124, %p125
      %p127 = scmp.ne.s32.totalorder %s115, %s116
      %p128 = scmp.eq.s32.totalorder %s18, 1
      %p129 = por %p127, %p128
      %p131 = scmp.ne.s32.totalorder %s116, %s130
      %p132 = scmp.eq.s32.totalorder %s18, 0
      %p133 = por %p131, %p132
      %s135 = sadd.s32 %s134, 1
      %p138 = scmp.eq.s32.totalorder %s12, 1
      %p139 = scmp.ne.s32.totalorder %s134, %s136
      %p140 = scmp.eq.s32.totalorder %s12, 0
      %p141 = por %p139, %p140
      %p142 = scmp.ne.s32.totalorder %s134, %s136
      %p143 = scmp.eq.s32.totalorder %s17, 1
      %p144 = por %p142, %p143
      %p145 = scmp.ne.s32.totalorder %s136, %s137
      %p146 = scmp.eq.s32.totalorder %s17, 0
      %p147 = por %p145, %p146
      %p148 = scmp.ne.s32.totalorder %s136, %s137
      %p149 = scmp.eq.s32.totalorder %s18, 1
      %p150 = por %p148, %p149
      %p152 = scmp.ne.s32.totalorder %s137, %s151
      %p153 = scmp.eq.s32.totalorder %s18, 0
      %p154 = por %p152, %p153
      %s156 = sadd.s32 %s155, 1
      %p159 = scmp.eq.s32.totalorder %s12, 1
      %p160 = scmp.ne.s32.totalorder %s155, %s157
      %p161 = scmp.eq.s32.totalorder %s12, 0
      %p162 = por %p160, %p161
      %p163 = scmp.ne.s32.totalorder %s155, %s157
      %p164 = scmp.eq.s32.totalorder %s17, 1
      %p165 = por %p163, %p164
      %p166 = scmp.ne.s32.totalorder %s157, %s158
      %p167 = scmp.eq.s32.totalorder %s17, 0
      %p168 = por %p166, %p167
      %p169 = scmp.ne.s32.totalorder %s157, %s158
      %p170 = scmp.eq.s32.totalorder %s18, 1
      %p171 = por %p169, %p170
      %p173 = scmp.ne.s32.totalorder %s158, %s172
      %p174 = scmp.eq.s32.totalorder %s18, 0
      %p175 = por %p173, %p174
      %s176 = ssub.s32 %s19, %s31
      %s177 = ssub.s32 %s20, %s27
      %s178 = sor.u32 %s176, %s177
      %p179 = scmp.eq.s32.totalorder %s178, 0
      %s181 = sadd.s32 %s180, 1
      %s182 = scalar_select %p179, %s180, %s181
      %p185 = pneg %p179
      %p186 = scmp.eq.s32.totalorder %s12, 1
      %p187 = por %p185, %p186
      %p188 = scmp.ne.s32.totalorder %s180, %s183
      %p189 = scmp.eq.s32.totalorder %s12, 0
      %p190 = por %p188, %p189
      %p191 = scmp.ne.s32.totalorder %s180, %s183
      %p192 = scmp.eq.s32.totalorder %s17, 1
      %p193 = por %p191, %p192
      %p194 = scmp.ne.s32.totalorder %s183, %s184
      %p195 = scmp.eq.s32.totalorder %s17, 0
      %p196 = por %p194, %p195
      %p197 = scmp.ne.s32.totalorder %s183, %s184
      %p198 = scmp.eq.s32.totalorder %s18, 1
      %p199 = por %p197, %p198
      %p201 = scmp.ne.s32.totalorder %s184, %s200
      %p202 = scmp.eq.s32.totalorder %s18, 0
      %p203 = por %p201, %p202
      %p204 = scmp.le.s32.totalorder 1, %s12
      %p205 = scmp.lt.s32.totalorder %s12, 3
      %p206 = pnand %p204, %p205
      %p207 = pneg %p206
      // Predicated region
      $region9: #{downsampling_module.3} parent=5 // pred_check
        _
      $region10: #{downsampling_module.3} parent=5 // pred_check_branch
        %209 = sbr.rel (%p206) target = $region12
      $region11: #{downsampling_module.3} parent=5 // pred_region
        %s210 = ssub.s32 %s12, 1
        // Predicated region
        $region13: #{downsampling_module.3} parent=11 // pred_check
          %p211 = pneg %p105
        $region14: #{downsampling_module.3} parent=11 // pred_check_branch
          %213 = sbr.rel (%p211) target = $region16
        $region15: #{downsampling_module.3} parent=11 // pred_region
          _
        $region16: #{downsampling_module.3} parent=11 // pred_fallthru
          _
        // Predicated region
        $region17: #{downsampling_module.3} parent=11 // pred_check
          %p214 = pneg %p126
        $region18: #{downsampling_module.3} parent=11 // pred_check_branch
          %216 = sbr.rel (%p214) target = $region20
        $region19: #{downsampling_module.3} parent=11 // pred_region
          _
        $region20: #{downsampling_module.3} parent=11 // pred_fallthru
          _
        // Predicated region
        $region21: #{downsampling_module.3} parent=11 // pred_check
          %p217 = pneg %p147
        $region22: #{downsampling_module.3} parent=11 // pred_check_branch
          %219 = sbr.rel (%p217) target = $region24
        $region23: #{downsampling_module.3} parent=11 // pred_region
          _
        $region24: #{downsampling_module.3} parent=11 // pred_fallthru
          _
        // Predicated region
        $region25: #{downsampling_module.3} parent=11 // pred_check
          %p220 = pneg %p168
        $region26: #{downsampling_module.3} parent=11 // pred_check_branch
          %222 = sbr.rel (%p220) target = $region28
        $region27: #{downsampling_module.3} parent=11 // pred_region
          _
        $region28: #{downsampling_module.3} parent=11 // pred_fallthru
          _
      $region12: #{downsampling_module.3} parent=5 // pred_fallthru
        _
      %p223 = scmp.lt.s32.totalorder %s12, 2
      // Predicated region
      $region29: #{downsampling_module.3} parent=5 // pred_check
        %p224 = pneg %p223
      $region30: #{downsampling_module.3} parent=5 // pred_check_branch
        %226 = sbr.rel (%p224) target = $region32
      $region31: #{downsampling_module.3} parent=5 // pred_region
        // Predicated region
        $region33: #{downsampling_module.3} parent=31 // pred_check
          %p227 = pneg %p46
        $region34: #{downsampling_module.3} parent=31 // pred_check_branch
          %229 = sbr.rel (%p227) target = $region36
        $region35: #{downsampling_module.3} parent=31 // pred_region
          %s230 = sand.u32 %s36, 1
          %s231 = sand.u32 %s36, 1
          %s232 = smul.addr %s231, 256
          %s233 = scalar_lea.vmem [#allocation2], %s232
          %s234 = smul.u32 8, %s20
          %s235 = ssub.s32 9, %s234
          %p236 = scmp.lt.s32.totalorder %s235, 8
          %s237 = scalar_select %p236, %s235, 8
          %s238 = smul.u32 256, %s237
          %s239 = smul.u32 %s238, 2
          %p240 = scmp.ne.s32.totalorder 0, %s239
          %s241 = smul.addr %s234, 2
          %s242 = smul.addr %s19, 36
          %s243 = sadd.s32 %s241, %s242
          %s244 = smul.addr %s243, 8
          %s245 = scalar_lea.vmem %s0, %s244
          %s246 = smul.u32 %s237, 2
          // Predicated region
          $region37: #{downsampling_module.3} parent=35 // pred_check
            %p247 = pneg %p240
          $region38: #{downsampling_module.3} parent=35 // pred_check_branch
            %249 = sbr.rel (%p247) target = $region40
          $region39: #{downsampling_module.3} parent=35 // pred_region
            // Predicated region
            $region41: #{downsampling_module.3} parent=39 // pred_check
              _
            $region42: #{downsampling_module.3} parent=39 // pred_check_branch
              %251 = sbr.rel (0) target = $region44
            $region43: #{downsampling_module.3} parent=39 // pred_region
              // Predicated region
              $region63: #{downsampling_module.3} parent=43 // pred_check
                _
              $region64: #{downsampling_module.3} parent=43 // pred_check_branch
                %365 = sbr.rel (0) target = $region66
              $region65: #{downsampling_module.3} parent=43 // pred_region
                %s366 = sshrl.u32 %s246, 4
                // While loop
                $region67: #{downsampling_module.3} parent=65 // loop_pre_header
                  _
                $region68: #{downsampling_module.3} parent=65 // loop_header
                  %s368 = sphi 0, %s370
                  %p369 = scmp.ge.s32.totalorder %s368, %s366
                  %s373 = sphi 0, %s442
                  %s374 = sphi %s245, %s445
                  %s375 = sphi %s233, %s446
                $region69: #{downsampling_module.3} parent=65 // loop_header_branch
                  %372 = sbr.rel (%p369) target = $region73
                $region70: #{downsampling_module.3} parent=65 // loop_body
                  %v376 = vld [vmem:[%s374] sm:$0xff]
                  %377 = vst [vmem:[%s375] sm:$0xff] %v376
                  %v378 = vld [vmem:[%s374 + $0x8] sm:$0xff]
                  %379 = vst [vmem:[%s375 + $0x8] sm:$0xff] %v378
                  %v380 = vld [vmem:[%s374 + $0x10] sm:$0xff]
                  %381 = vst [vmem:[%s375 + $0x10] sm:$0xff] %v380
                  %v382 = vld [vmem:[%s374 + $0x18] sm:$0xff]
                  %383 = vst [vmem:[%s375 + $0x18] sm:$0xff] %v382
                  %v384 = vld [vmem:[%s374 + $0x20] sm:$0xff]
                  %385 = vst [vmem:[%s375 + $0x20] sm:$0xff] %v384
                  %v386 = vld [vmem:[%s374 + $0x28] sm:$0xff]
                  %387 = vst [vmem:[%s375 + $0x28] sm:$0xff] %v386
                  %v388 = vld [vmem:[%s374 + $0x30] sm:$0xff]
                  %389 = vst [vmem:[%s375 + $0x30] sm:$0xff] %v388
                  %v390 = vld [vmem:[%s374 + $0x38] sm:$0xff]
                  %391 = vst [vmem:[%s375 + $0x38] sm:$0xff] %v390
                  %v392 = vld [vmem:[%s374 + $0x40] sm:$0xff]
                  %393 = vst [vmem:[%s375 + $0x40] sm:$0xff] %v392
                  %v394 = vld [vmem:[%s374 + $0x48] sm:$0xff]
                  %395 = vst [vmem:[%s375 + $0x48] sm:$0xff] %v394
                  %v396 = vld [vmem:[%s374 + $0x50] sm:$0xff]
                  %397 = vst [vmem:[%s375 + $0x50] sm:$0xff] %v396
                  %v398 = vld [vmem:[%s374 + $0x58] sm:$0xff]
                  %399 = vst [vmem:[%s375 + $0x58] sm:$0xff] %v398
                  %v400 = vld [vmem:[%s374 + $0x60] sm:$0xff]
                  %401 = vst [vmem:[%s375 + $0x60] sm:$0xff] %v400
                  %v402 = vld [vmem:[%s374 + $0x68] sm:$0xff]
                  %403 = vst [vmem:[%s375 + $0x68] sm:$0xff] %v402
                  %v404 = vld [vmem:[%s374 + $0x70] sm:$0xff]
                  %405 = vst [vmem:[%s375 + $0x70] sm:$0xff] %v404
                  %v406 = vld [vmem:[%s374 + $0x78] sm:$0xff]
                  %407 = vst [vmem:[%s375 + $0x78] sm:$0xff] %v406
                  %v408 = vld [vmem:[%s374 + $0x90] sm:$0xff]
                  %409 = vst [vmem:[%s375 + $0x80] sm:$0xff] %v408
                  %v410 = vld [vmem:[%s374 + $0x98] sm:$0xff]
                  %411 = vst [vmem:[%s375 + $0x88] sm:$0xff] %v410
                  %v412 = vld [vmem:[%s374 + $0xa0] sm:$0xff]
                  %413 = vst [vmem:[%s375 + $0x90] sm:$0xff] %v412
                  %v414 = vld [vmem:[%s374 + $0xa8] sm:$0xff]
                  %415 = vst [vmem:[%s375 + $0x98] sm:$0xff] %v414
                  %v416 = vld [vmem:[%s374 + $0xb0] sm:$0xff]
                  %417 = vst [vmem:[%s375 + $0xa0] sm:$0xff] %v416
                  %v418 = vld [vmem:[%s374 + $0xb8] sm:$0xff]
                  %419 = vst [vmem:[%s375 + $0xa8] sm:$0xff] %v418
                  %v420 = vld [vmem:[%s374 + $0xc0] sm:$0xff]
                  %421 = vst [vmem:[%s375 + $0xb0] sm:$0xff] %v420
                  %v422 = vld [vmem:[%s374 + $0xc8] sm:$0xff]
                  %423 = vst [vmem:[%s375 + $0xb8] sm:$0xff] %v422
                  %v424 = vld [vmem:[%s374 + $0xd0] sm:$0xff]
                  %425 = vst [vmem:[%s375 + $0xc0] sm:$0xff] %v424
                  %v426 = vld [vmem:[%s374 + $0xd8] sm:$0xff]
                  %427 = vst [vmem:[%s375 + $0xc8] sm:$0xff] %v426
                  %v428 = vld [vmem:[%s374 + $0xe0] sm:$0xff]
                  %429 = vst [vmem:[%s375 + $0xd0] sm:$0xff] %v428
                  %v430 = vld [vmem:[%s374 + $0xe8] sm:$0xff]
                  %431 = vst [vmem:[%s375 + $0xd8] sm:$0xff] %v430
                  %v432 = vld [vmem:[%s374 + $0xf0] sm:$0xff]
                  %433 = vst [vmem:[%s375 + $0xe0] sm:$0xff] %v432
                  %v434 = vld [vmem:[%s374 + $0xf8] sm:$0xff]
                  %435 = vst [vmem:[%s375 + $0xe8] sm:$0xff] %v434
                  %v436 = vld [vmem:[%s374 + $0x100] sm:$0xff]
                  %437 = vst [vmem:[%s375 + $0xf0] sm:$0xff] %v436
                  %v438 = vld [vmem:[%s374 + $0x108] sm:$0xff]
                  %439 = vst [vmem:[%s375 + $0xf8] sm:$0xff] %v438
                  %s440 = sadd.s32 1, %s373
                  %p441 = scmp.ge.s32.totalorder %s440, %s366
                  %s442 = scalar_select %p441, 0, %s440
                  %s443 = smul.u32 %s442, 128
                  %s444 = smul.u32 %s442, 128
                  %s445 = scalar_lea.vmem %s245, %s443
                  %s446 = scalar_lea.vmem %s233, %s444 [#allocation2]
                $region71: #{downsampling_module.3} parent=65 // loop_footer
                  %s370 = sadd.s32 %s368, 1
                $region72: #{downsampling_module.3} parent=65 // loop_footer_branch
                  %367 = sbr.rel target = $region68
                $region73: #{downsampling_module.3} parent=65 // loop_exit
                  _
                %s447 = sshrl.u32 %s246, 4
                %s448 = sand.u32 %s246, 15
                %s449 = smul.u32 %s447, 16
                %s450 = smul.u32 8, %s449
                %s451 = scalar_lea.vmem %s245, %s450
                %s452 = smul.u32 8, %s449
                %s453 = scalar_lea.vmem %s233, %s452 [#allocation2]
                // While loop
                $region74: #{downsampling_module.3} parent=65 // loop_pre_header
                  _
                $region75: #{downsampling_module.3} parent=65 // loop_header
                  %s455 = sphi 0, %s457
                  %p456 = scmp.ge.s32.totalorder %s455, %s448
                  %s460 = sphi 0, %s469
                  %s461 = sphi %s451, %s472
                  %s462 = sphi %s453, %s473
                $region76: #{downsampling_module.3} parent=65 // loop_header_branch
                  %459 = sbr.rel (%p456) target = $region80
                $region77: #{downsampling_module.3} parent=65 // loop_body
                  %v463 = vld [vmem:[%s461] sm:$0xff]
                  %464 = vst [vmem:[%s462] sm:$0xff] %v463
                  %v465 = vld [vmem:[%s461 + $0x90] sm:$0xff]
                  %466 = vst [vmem:[%s462 + $0x80] sm:$0xff] %v465
                  %s467 = sadd.s32 1, %s460
                  %p468 = scmp.ge.s32.totalorder %s467, %s448
                  %s469 = scalar_select %p468, 0, %s467
                  %s470 = smul.u32 %s469, 8
                  %s471 = smul.u32 %s469, 8
                  %s472 = scalar_lea.vmem %s451, %s470
                  %s473 = scalar_lea.vmem %s453, %s471 [#allocation2]
                $region78: #{downsampling_module.3} parent=65 // loop_footer
                  %s457 = sadd.s32 %s455, 1
                $region79: #{downsampling_module.3} parent=65 // loop_footer_branch
                  %454 = sbr.rel target = $region75
                $region80: #{downsampling_module.3} parent=65 // loop_exit
                  _
              $region66: #{downsampling_module.3} parent=43 // pred_fallthru
                _
              // Predicated region
              $region81: #{downsampling_module.3} parent=43 // pred_check
                _
              $region82: #{downsampling_module.3} parent=43 // pred_check_branch
                %475 = sbr.rel target = $region84
              $region83: #{downsampling_module.3} parent=43 // pred_region
                _
              $region84: #{downsampling_module.3} parent=43 // pred_fallthru
                _
            $region44: #{downsampling_module.3} parent=39 // pred_fallthru
              _
            // Predicated region
            $region45: #{downsampling_module.3} parent=39 // pred_check
              _
            $region46: #{downsampling_module.3} parent=39 // pred_check_branch
              %253 = sbr.rel target = $region48
            $region47: #{downsampling_module.3} parent=39 // pred_region
              %s255 = ssub.s32 256, 1
              %s256 = sshrl.u32 %s246, 4
              // While loop
              $region49: #{downsampling_module.3} parent=47 // loop_pre_header
                _
              $region50: #{downsampling_module.3} parent=47 // loop_header
                %s258 = sphi 0, %s260
                %p259 = scmp.ge.s32.totalorder %s258, %s256
                %s263 = sphi 0, %s332
                %s264 = sphi %s245, %s335
                %s265 = sphi %s233, %s336
              $region51: #{downsampling_module.3} parent=47 // loop_header_branch
                %262 = sbr.rel (%p259) target = $region55
              $region52: #{downsampling_module.3} parent=47 // loop_body
                %v266 = vld [vmem:[%s264] sm:%s255]
                %267 = vst [vmem:[%s265] sm:%s255] %v266
                %v268 = vld [vmem:[%s264 + $0x8] sm:%s255]
                %269 = vst [vmem:[%s265 + $0x8] sm:%s255] %v268
                %v270 = vld [vmem:[%s264 + $0x10] sm:%s255]
                %271 = vst [vmem:[%s265 + $0x10] sm:%s255] %v270
                %v272 = vld [vmem:[%s264 + $0x18] sm:%s255]
                %273 = vst [vmem:[%s265 + $0x18] sm:%s255] %v272
                %v274 = vld [vmem:[%s264 + $0x20] sm:%s255]
                %275 = vst [vmem:[%s265 + $0x20] sm:%s255] %v274
                %v276 = vld [vmem:[%s264 + $0x28] sm:%s255]
                %277 = vst [vmem:[%s265 + $0x28] sm:%s255] %v276
                %v278 = vld [vmem:[%s264 + $0x30] sm:%s255]
                %279 = vst [vmem:[%s265 + $0x30] sm:%s255] %v278
                %v280 = vld [vmem:[%s264 + $0x38] sm:%s255]
                %281 = vst [vmem:[%s265 + $0x38] sm:%s255] %v280
                %v282 = vld [vmem:[%s264 + $0x40] sm:%s255]
                %283 = vst [vmem:[%s265 + $0x40] sm:%s255] %v282
                %v284 = vld [vmem:[%s264 + $0x48] sm:%s255]
                %285 = vst [vmem:[%s265 + $0x48] sm:%s255] %v284
                %v286 = vld [vmem:[%s264 + $0x50] sm:%s255]
                %287 = vst [vmem:[%s265 + $0x50] sm:%s255] %v286
                %v288 = vld [vmem:[%s264 + $0x58] sm:%s255]
                %289 = vst [vmem:[%s265 + $0x58] sm:%s255] %v288
                %v290 = vld [vmem:[%s264 + $0x60] sm:%s255]
                %291 = vst [vmem:[%s265 + $0x60] sm:%s255] %v290
                %v292 = vld [vmem:[%s264 + $0x68] sm:%s255]
                %293 = vst [vmem:[%s265 + $0x68] sm:%s255] %v292
                %v294 = vld [vmem:[%s264 + $0x70] sm:%s255]
                %295 = vst [vmem:[%s265 + $0x70] sm:%s255] %v294
                %v296 = vld [vmem:[%s264 + $0x78] sm:%s255]
                %297 = vst [vmem:[%s265 + $0x78] sm:%s255] %v296
                %v298 = vld [vmem:[%s264 + $0x90] sm:%s255]
                %299 = vst [vmem:[%s265 + $0x80] sm:%s255] %v298
                %v300 = vld [vmem:[%s264 + $0x98] sm:%s255]
                %301 = vst [vmem:[%s265 + $0x88] sm:%s255] %v300
                %v302 = vld [vmem:[%s264 + $0xa0] sm:%s255]
                %303 = vst [vmem:[%s265 + $0x90] sm:%s255] %v302
                %v304 = vld [vmem:[%s264 + $0xa8] sm:%s255]
                %305 = vst [vmem:[%s265 + $0x98] sm:%s255] %v304
                %v306 = vld [vmem:[%s264 + $0xb0] sm:%s255]
                %307 = vst [vmem:[%s265 + $0xa0] sm:%s255] %v306
                %v308 = vld [vmem:[%s264 + $0xb8] sm:%s255]
                %309 = vst [vmem:[%s265 + $0xa8] sm:%s255] %v308
                %v310 = vld [vmem:[%s264 + $0xc0] sm:%s255]
                %311 = vst [vmem:[%s265 + $0xb0] sm:%s255] %v310
                %v312 = vld [vmem:[%s264 + $0xc8] sm:%s255]
                %313 = vst [vmem:[%s265 + $0xb8] sm:%s255] %v312
                %v314 = vld [vmem:[%s264 + $0xd0] sm:%s255]
                %315 = vst [vmem:[%s265 + $0xc0] sm:%s255] %v314
                %v316 = vld [vmem:[%s264 + $0xd8] sm:%s255]
                %317 = vst [vmem:[%s265 + $0xc8] sm:%s255] %v316
                %v318 = vld [vmem:[%s264 + $0xe0] sm:%s255]
                %319 = vst [vmem:[%s265 + $0xd0] sm:%s255] %v318
                %v320 = vld [vmem:[%s264 + $0xe8] sm:%s255]
                %321 = vst [vmem:[%s265 + $0xd8] sm:%s255] %v320
                %v322 = vld [vmem:[%s264 + $0xf0] sm:%s255]
                %323 = vst [vmem:[%s265 + $0xe0] sm:%s255] %v322
                %v324 = vld [vmem:[%s264 + $0xf8] sm:%s255]
                %325 = vst [vmem:[%s265 + $0xe8] sm:%s255] %v324
                %v326 = vld [vmem:[%s264 + $0x100] sm:%s255]
                %327 = vst [vmem:[%s265 + $0xf0] sm:%s255] %v326
                %v328 = vld [vmem:[%s264 + $0x108] sm:%s255]
                %329 = vst [vmem:[%s265 + $0xf8] sm:%s255] %v328
                %s330 = sadd.s32 1, %s263
                %p331 = scmp.ge.s32.totalorder %s330, %s256
                %s332 = scalar_select %p331, 0, %s330
                %s333 = smul.u32 %s332, 128
                %s334 = smul.u32 %s332, 128
                %s335 = scalar_lea.vmem %s245, %s333
                %s336 = scalar_lea.vmem %s233, %s334 [#allocation2]
              $region53: #{downsampling_module.3} parent=47 // loop_footer
                %s260 = sadd.s32 %s258, 1
              $region54: #{downsampling_module.3} parent=47 // loop_footer_branch
                %257 = sbr.rel target = $region50
              $region55: #{downsampling_module.3} parent=47 // loop_exit
                _
              %s337 = sshrl.u32 %s246, 4
              %s338 = sand.u32 %s246, 15
              %s339 = smul.u32 %s337, 16
              %s340 = smul.u32 8, %s339
              %s341 = scalar_lea.vmem %s245, %s340
              %s342 = smul.u32 8, %s339
              %s343 = scalar_lea.vmem %s233, %s342 [#allocation2]
              // While loop
              $region56: #{downsampling_module.3} parent=47 // loop_pre_header
                _
              $region57: #{downsampling_module.3} parent=47 // loop_header
                %s345 = sphi 0, %s347
                %p346 = scmp.ge.s32.totalorder %s345, %s338
                %s350 = sphi 0, %s359
                %s351 = sphi %s341, %s362
                %s352 = sphi %s343, %s363
              $region58: #{downsampling_module.3} parent=47 // loop_header_branch
                %349 = sbr.rel (%p346) target = $region62
              $region59: #{downsampling_module.3} parent=47 // loop_body
                %v353 = vld [vmem:[%s351] sm:%s255]
                %354 = vst [vmem:[%s352] sm:%s255] %v353
                %v355 = vld [vmem:[%s351 + $0x90] sm:%s255]
                %356 = vst [vmem:[%s352 + $0x80] sm:%s255] %v355
                %s357 = sadd.s32 1, %s350
                %p358 = scmp.ge.s32.totalorder %s357, %s338
                %s359 = scalar_select %p358, 0, %s357
                %s360 = smul.u32 %s359, 8
                %s361 = smul.u32 %s359, 8
                %s362 = scalar_lea.vmem %s341, %s360
                %s363 = scalar_lea.vmem %s343, %s361 [#allocation2]
              $region60: #{downsampling_module.3} parent=47 // loop_footer
                %s347 = sadd.s32 %s345, 1
              $region61: #{downsampling_module.3} parent=47 // loop_footer_branch
                %344 = sbr.rel target = $region57
              $region62: #{downsampling_module.3} parent=47 // loop_exit
                _
            $region48: #{downsampling_module.3} parent=39 // pred_fallthru
              _
          $region40: #{downsampling_module.3} parent=35 // pred_fallthru
            _
          %476 = vnop
        $region36: #{downsampling_module.3} parent=31 // pred_fallthru
          _
        // Predicated region
        $region85: #{downsampling_module.3} parent=31 // pred_check
          %p477 = pneg %p78
        $region86: #{downsampling_module.3} parent=31 // pred_check_branch
          %479 = sbr.rel (%p477) target = $region88
        $region87: #{downsampling_module.3} parent=31 // pred_region
          %s480 = sadd.s32 %s20, 1
          %s481 = smul.u32 %s480, 8
          %p482 = scmp.lt.s32.totalorder %s19, 1
          %s483 = scalar_select %p482, %s19, 1
          %p484 = scmp.lt.s32.totalorder %s481, 8
          %s485 = scalar_select %p484, %s481, 8
          %s486 = smul.addr %s485, 2
          %s487 = smul.addr %s483, 36
          %s488 = sadd.s32 %s486, %s487
          %s489 = smul.addr %s488, 8
          %s490 = scalar_lea.vmem %s1, %s489
          %s491 = sadd.s32 %s20, 1
          %s492 = smul.u32 %s491, 8
        $region88: #{downsampling_module.3} parent=31 // pred_fallthru
          _
      $region32: #{downsampling_module.3} parent=5 // pred_fallthru
        _
      %p493 = scmp.le.s32.totalorder 1, %s12
      %p494 = scmp.lt.s32.totalorder %s12, 3
      %p495 = pnand %p493, %p494
      %p496 = pneg %p495
      // Predicated region
      $region89: #{downsampling_module.3} parent=5 // pred_check
        _
      $region90: #{downsampling_module.3} parent=5 // pred_check_branch
        %498 = sbr.rel (%p495) target = $region92
      $region91: #{downsampling_module.3} parent=5 // pred_region
        %s499 = ssub.s32 %s12, 1
        %s500 = sand.u32 %s39, 1
        %s501 = sand.u32 %s39, 1
        %s502 = smul.addr %s501, 256
        %s503 = scalar_lea.vmem [#allocation2], %s502
        // Predicated region
        $region93: #{downsampling_module.3} parent=91 // pred_check
          %p504 = pneg %p52
        $region94: #{downsampling_module.3} parent=91 // pred_check_branch
          %506 = sbr.rel (%p504) target = $region96
        $region95: #{downsampling_module.3} parent=91 // pred_region
          _
        $region96: #{downsampling_module.3} parent=91 // pred_fallthru
          _
        %s507 = sand.u32 %s39, 1
        %s508 = sand.u32 %s39, 1
        %s509 = smul.addr %s508, 256
        %s510 = scalar_lea.vmem [#allocation2], %s509
        %p511 = pneg %p52
        %p512 = pneg %p49
        %s513 = sadd.s32 %s22, 1
        %s514 = smul.u32 %s513, 8
        %p515 = scmp.lt.s32.totalorder %s21, 1
        %s516 = scalar_select %p515, %s21, 1
        %p517 = scmp.lt.s32.totalorder %s514, 8
        %s518 = scalar_select %p517, %s514, 8
        %s519 = smul.addr %s518, 2
        %s520 = smul.addr %s516, 36
        %s521 = sadd.s32 %s519, %s520
        %s522 = smul.addr %s521, 8
        %s523 = scalar_lea.vmem %s1, %s522
        %p524 = pneg %p84
        %p525 = pneg %p81
        %p526 = pneg %p105
        %p527 = pneg %p102
        %p528 = pneg %p126
        %p529 = pneg %p123
        %p530 = pneg %p147
        %p531 = pneg %p144
        %p532 = pneg %p168
        %p533 = pneg %p165
        %p534 = pneg %p196
        %p535 = pneg %p193
        %s536 = smul.u32 8, %s22
        %p537 = scmp.lt.s32.totalorder %s21, 1
        %s538 = scalar_select %p537, %s21, 1
        %p539 = scmp.lt.s32.totalorder %s536, 7
        %s540 = scalar_select %p539, %s536, 7
        %s541 = smul.addr %s538, 8
        %s542 = sadd.s32 %s540, %s541
        %s543 = smul.addr %s542, 8
        %s544 = scalar_lea.vmem %s6, %s543
        %s545 = smul.u32 8, %s22
        %s546 = ssub.s32 9, %s545
        %p547 = scmp.lt.s32.totalorder %s546, 8
        %s548 = scalar_select %p547, %s546, 8
        %s549 = smul.u32 256, %s548
        %s550 = smul.u32 %s549, 2
        %s551 = sadd.s32 %s22, 1
        %s552 = smul.u32 %s551, 8
        %p553 = scmp.lt.s32.totalorder %s21, 1
        %s554 = scalar_select %p553, %s21, 1
        %p555 = scmp.lt.s32.totalorder %s552, 8
        %s556 = scalar_select %p555, %s552, 8
        %s557 = smul.addr %s556, 2
        %s558 = smul.addr %s554, 36
        %s559 = sadd.s32 %s557, %s558
        %s560 = smul.addr %s559, 8
        %s561 = scalar_lea.vmem %s1, %s560
        %s562 = sadd.s32 %s22, 1
        %s563 = smul.u32 %s562, 8
        %s564 = smul.u32 8, %s22
        %p565 = scmp.lt.s32.totalorder %s21, 1
        %s566 = scalar_select %p565, %s21, 1
        %p567 = scmp.lt.s32.totalorder %s564, 7
        %s568 = scalar_select %p567, %s564, 7
        %s569 = smul.addr %s566, 8
        %s570 = sadd.s32 %s568, %s569
        %s571 = smul.addr %s570, 8
        %s572 = scalar_lea.vmem %s6, %s571
        %s573 = smul.u32 8, %s22
        %v575 = vld [vmem:[%s2] sm:$0x1]
        %v576 = vld [vmem:[%s3] sm:$0x1]
        %v577 = vld [vmem:[%s503] sm:$0xff]
        %v578 = vld [vmem:[%s503 + $0x8] sm:$0x1]
        %v579 = vld [vmem:[%s503 + $0x10] sm:$0xff]
        %v580 = vld [vmem:[%s503 + $0x18] sm:$0x1]
        %v581 = vld [vmem:[%s503 + $0x20] sm:$0xff]
        %v582 = vld [vmem:[%s503 + $0x28] sm:$0x1]
        %v583 = vld [vmem:[%s503 + $0x30] sm:$0xff]
        %v584 = vld [vmem:[%s503 + $0x38] sm:$0x1]
        %v585 = vld [vmem:[%s503 + $0x40] sm:$0xff]
        %v586 = vld [vmem:[%s503 + $0x48] sm:$0x1]
        %v587 = vld [vmem:[%s503 + $0x50] sm:$0xff]
        %v588 = vld [vmem:[%s503 + $0x58] sm:$0x1]
        %v589 = vld [vmem:[%s503 + $0x60] sm:$0xff]
        %v590 = vld [vmem:[%s503 + $0x68] sm:$0x1]
        %v591 = vld [vmem:[%s503 + $0x70] sm:$0xff]
        %v592 = vld [vmem:[%s503 + $0x78] sm:$0x1]
        %v593 = vld [vmem:[%s503 + $0x80] sm:$0xff]
        %v594 = vld [vmem:[%s503 + $0x88] sm:$0x1]
        %v595 = vld [vmem:[%s503 + $0x90] sm:$0xff]
        %v596 = vld [vmem:[%s503 + $0x98] sm:$0x1]
        %v597 = vld [vmem:[%s503 + $0xa0] sm:$0xff]
        %v598 = vld [vmem:[%s503 + $0xa8] sm:$0x1]
        %v599 = vld [vmem:[%s503 + $0xb0] sm:$0xff]
        %v600 = vld [vmem:[%s503 + $0xb8] sm:$0x1]
        %v601 = vld [vmem:[%s503 + $0xc0] sm:$0xff]
        %v602 = vld [vmem:[%s503 + $0xc8] sm:$0x1]
        %v603 = vld [vmem:[%s503 + $0xd0] sm:$0xff]
        %v604 = vld [vmem:[%s503 + $0xd8] sm:$0x1]
        %v605 = vld [vmem:[%s503 + $0xe0] sm:$0xff]
        %v606 = vld [vmem:[%s503 + $0xe8] sm:$0x1]
        %v607 = vld [vmem:[%s503 + $0xf0] sm:$0xff]
        %v608 = vld [vmem:[%s503 + $0xf8] sm:$0x1]
        %v610 = vlaneseq
        %v611 = vshrl.u32 %v610, 7
        %v612 = vsub.s32 0, %v611
        %v613 = vrot.slane %v575, %v612
        %v615 = vmul.f32 %v577, %v613
        %v616 = vmul.f32 %v578, %v613
        %v617 = vmul.f32 %v579, %v613
        %v618 = vmul.f32 %v580, %v613
        %v619 = vmul.f32 %v581, %v613
        %v620 = vmul.f32 %v582, %v613
        %v621 = vmul.f32 %v583, %v613
        %v622 = vmul.f32 %v584, %v613
        %v623 = vmul.f32 %v585, %v613
        %v624 = vmul.f32 %v586, %v613
        %v625 = vmul.f32 %v587, %v613
        %v626 = vmul.f32 %v588, %v613
        %v627 = vmul.f32 %v589, %v613
        %v628 = vmul.f32 %v590, %v613
        %v629 = vmul.f32 %v591, %v613
        %v630 = vmul.f32 %v592, %v613
        %v631 = vmul.f32 %v593, %v613
        %v632 = vmul.f32 %v594, %v613
        %v633 = vmul.f32 %v595, %v613
        %v634 = vmul.f32 %v596, %v613
        %v635 = vmul.f32 %v597, %v613
        %v636 = vmul.f32 %v598, %v613
        %v637 = vmul.f32 %v599, %v613
        %v638 = vmul.f32 %v600, %v613
        %v639 = vmul.f32 %v601, %v613
        %v640 = vmul.f32 %v602, %v613
        %v641 = vmul.f32 %v603, %v613
        %v642 = vmul.f32 %v604, %v613
        %v643 = vmul.f32 %v605, %v613
        %v644 = vmul.f32 %v606, %v613
        %v645 = vmul.f32 %v607, %v613
        %v646 = vmul.f32 %v608, %v613
        %v648 = vlaneseq
        %v649 = vshrl.u32 %v648, 7
        %v650 = vsub.s32 0, %v649
        %v651 = vrot.slane %v576, %v650
        %v653 = vadd.f32 %v615, %v651
        %v654 = vadd.f32 %v616, %v651
        %v655 = vadd.f32 %v617, %v651
        %v656 = vadd.f32 %v618, %v651
        %v657 = vadd.f32 %v619, %v651
        %v658 = vadd.f32 %v620, %v651
        %v659 = vadd.f32 %v621, %v651
        %v660 = vadd.f32 %v622, %v651
        %v661 = vadd.f32 %v623, %v651
        %v662 = vadd.f32 %v624, %v651
        %v663 = vadd.f32 %v625, %v651
        %v664 = vadd.f32 %v626, %v651
        %v665 = vadd.f32 %v627, %v651
        %v666 = vadd.f32 %v628, %v651
        %v667 = vadd.f32 %v629, %v651
        %v668 = vadd.f32 %v630, %v651
        %v669 = vadd.f32 %v631, %v651
        %v670 = vadd.f32 %v632, %v651
        %v671 = vadd.f32 %v633, %v651
        %v672 = vadd.f32 %v634, %v651
        %v673 = vadd.f32 %v635, %v651
        %v674 = vadd.f32 %v636, %v651
        %v675 = vadd.f32 %v637, %v651
        %v676 = vadd.f32 %v638, %v651
        %v677 = vadd.f32 %v639, %v651
        %v678 = vadd.f32 %v640, %v651
        %v679 = vadd.f32 %v641, %v651
        %v680 = vadd.f32 %v642, %v651
        %v681 = vadd.f32 %v643, %v651
        %v682 = vadd.f32 %v644, %v651
        %v683 = vadd.f32 %v645, %v651
        %v684 = vadd.f32 %v646, %v651
        %v685 = vmax.f32 %v653, 0.0
        %v686 = vmax.f32 %v654, 0.0
        %v687 = vmax.f32 %v655, 0.0
        %v688 = vmax.f32 %v656, 0.0
        %v689 = vmax.f32 %v657, 0.0
        %v690 = vmax.f32 %v658, 0.0
        %v691 = vmax.f32 %v659, 0.0
        %v692 = vmax.f32 %v660, 0.0
        %v693 = vmax.f32 %v661, 0.0
        %v694 = vmax.f32 %v662, 0.0
        %v695 = vmax.f32 %v663, 0.0
        %v696 = vmax.f32 %v664, 0.0
        %v697 = vmax.f32 %v665, 0.0
        %v698 = vmax.f32 %v666, 0.0
        %v699 = vmax.f32 %v667, 0.0
        %v700 = vmax.f32 %v668, 0.0
        %v701 = vmax.f32 %v669, 0.0
        %v702 = vmax.f32 %v670, 0.0
        %v703 = vmax.f32 %v671, 0.0
        %v704 = vmax.f32 %v672, 0.0
        %v705 = vmax.f32 %v673, 0.0
        %v706 = vmax.f32 %v674, 0.0
        %v707 = vmax.f32 %v675, 0.0
        %v708 = vmax.f32 %v676, 0.0
        %v709 = vmax.f32 %v677, 0.0
        %v710 = vmax.f32 %v678, 0.0
        %v711 = vmax.f32 %v679, 0.0
        %v712 = vmax.f32 %v680, 0.0
        %v713 = vmax.f32 %v681, 0.0
        %v714 = vmax.f32 %v682, 0.0
        %v715 = vmax.f32 %v683, 0.0
        %v716 = vmax.f32 %v684, 0.0
        %v717 = vld [vmem:[%s561] sm:$0xff]
        %v718 = vld [vmem:[%s561 + $0x8] sm:$0x1]
        %v719 = vmul.f32 %v717, %v613
        %v720 = vmul.f32 %v718, %v613
        %v721 = vadd.f32 %v719, %v651
        %v722 = vadd.f32 %v720, %v651
        %v723 = vmax.f32 %v721, 0.0
        %v724 = vmax.f32 %v722, 0.0
        %v725 = vlaneseq
        %v726 = vshrl.u32 %v725, 7
        %v727 = vadd.s32 %v726, 8
        %v728 = vlaneseq
        %v729 = vand.u32 %v728, 127
        %vm730 = vcmp.ge.s32.totalorder %v729, 4
        %v731 = vsel %vm730, 1, 0
        %v732 = vmul.u32 %v726, 2
        %v733 = vmul.u32 %v727, 2
        %v734 = vadd.s32 %v732, %v731
        %v735 = vadd.s32 %v733, %v731
        %vm736 = vcmp.ge.s32.totalorder %v734, 1
        %vm737 = vcmp.ge.s32.totalorder %v735, 1
        %vm738 = vcmp.le.s32.totalorder %v734, 16
        %vm739 = vcmp.le.s32.totalorder %v735, 16
        %vm740 = vmand %vm736, %vm738
        %vm741 = vmand %vm737, %vm739
        %s742 = smul.u32 %s22, 8
        %v743 = vstv %s742
        %v744 = vadd.s32 %v743, 1
        %v745 = vadd.s32 %v743, 2
        %v746 = vadd.s32 %v743, 3
        %v747 = vadd.s32 %v743, 4
        %v748 = vadd.s32 %v743, 5
        %v749 = vadd.s32 %v743, 6
        %v750 = vadd.s32 %v743, 7
        %vm751 = vcmp.ge.s32.totalorder %v743, 1
        %vm752 = vcmp.ge.s32.totalorder %v744, 1
        %vm753 = vcmp.ge.s32.totalorder %v745, 1
        %vm754 = vcmp.ge.s32.totalorder %v746, 1
        %vm755 = vcmp.ge.s32.totalorder %v747, 1
        %vm756 = vcmp.ge.s32.totalorder %v748, 1
        %vm757 = vcmp.ge.s32.totalorder %v749, 1
        %vm758 = vcmp.ge.s32.totalorder %v750, 1
        %s759 = sadd.s32 %s22, 1
        %s760 = smul.u32 %s759, 16
        %p761 = scmp.le.s32.totalorder %s760, 16
        %v762 = vsel %vm740, 1, 0
        %v763 = vsel %vm741, 1, 0
        %vm764 = vcmp.eq.s32.totalorder %v762, 1
        %vm765 = vcmp.eq.s32.totalorder %v763, 1
        %v766 = vsel %vm751, 1, 0
        %v767 = vsel %vm752, 1, 0
        %v768 = vsel %vm753, 1, 0
        %v769 = vsel %vm754, 1, 0
        %v770 = vsel %vm755, 1, 0
        %v771 = vsel %vm756, 1, 0
        %v772 = vsel %vm757, 1, 0
        %v773 = vsel %vm758, 1, 0
        %vm774 = vcmp.eq.s32.totalorder %v766, 1
        %vm775 = vcmp.eq.s32.totalorder %v767, 1
        %vm776 = vcmp.eq.s32.totalorder %v768, 1
        %vm777 = vcmp.eq.s32.totalorder %v769, 1
        %vm778 = vcmp.eq.s32.totalorder %v770, 1
        %vm779 = vcmp.eq.s32.totalorder %v771, 1
        %vm780 = vcmp.eq.s32.totalorder %v772, 1
        %vm781 = vcmp.eq.s32.totalorder %v773, 1
        %vm782 = vmand %vm764, %vm774
        %vm783 = vmand %vm765, %vm774
        %vm784 = vmand %vm764, %vm775
        %vm785 = vmand %vm765, %vm775
        %vm786 = vmand %vm764, %vm776
        %vm787 = vmand %vm765, %vm776
        %vm788 = vmand %vm764, %vm777
        %vm789 = vmand %vm765, %vm777
        %vm790 = vmand %vm764, %vm778
        %vm791 = vmand %vm765, %vm778
        %vm792 = vmand %vm764, %vm779
        %vm793 = vmand %vm765, %vm779
        %vm794 = vmand %vm764, %vm780
        %vm795 = vmand %vm765, %vm780
        %vm796 = vmand %vm764, %vm781
        %vm797 = vmand %vm765, %vm781
        %v798 = vsel %vm782, %v685, 0.0
        %v799 = vsel %vm783, %v686, 0.0
        %v800 = vsel %vm784, %v687, 0.0
        %v801 = vsel %vm785, %v688, 0.0
        %v802 = vsel %vm786, %v689, 0.0
        %v803 = vsel %vm787, %v690, 0.0
        %v804 = vsel %vm788, %v691, 0.0
        %v805 = vsel %vm789, %v692, 0.0
        %v806 = vsel %vm790, %v693, 0.0
        %v807 = vsel %vm791, %v694, 0.0
        %v808 = vsel %vm792, %v695, 0.0
        %v809 = vsel %vm793, %v696, 0.0
        %v810 = vsel %vm794, %v697, 0.0
        %v811 = vsel %vm795, %v698, 0.0
        %v812 = vsel %vm796, %v699, 0.0
        %v813 = vsel %vm797, %v700, 0.0
        %v814 = vsel %vm764, %v701, 0.0
        %v815 = vsel %vm765, %v702, 0.0
        %v816 = vsel %vm764, %v703, 0.0
        %v817 = vsel %vm765, %v704, 0.0
        %v818 = vsel %vm764, %v705, 0.0
        %v819 = vsel %vm765, %v706, 0.0
        %v820 = vsel %vm764, %v707, 0.0
        %v821 = vsel %vm765, %v708, 0.0
        %v822 = vsel %vm764, %v709, 0.0
        %v823 = vsel %vm765, %v710, 0.0
        %v824 = vsel %vm764, %v711, 0.0
        %v825 = vsel %vm765, %v712, 0.0
        %v826 = vsel %vm764, %v713, 0.0
        %v827 = vsel %vm765, %v714, 0.0
        %v828 = vsel %vm764, %v715, 0.0
        %v829 = vsel %vm765, %v716, 0.0
        %s830 = scalar_select %p761, 1, 0
        %v831 = vstv %s830
        %vm832 = vcmp.eq.s32.totalorder %v831, 1
        %vm833 = vmand %vm740, %vm832
        %vm834 = vmand %vm741, %vm832
        %v835 = vsel %vm833, %v723, 0.0
        %v836 = vsel %vm834, %v724, 0.0
        %v837 = vld [vmem:[%s4] sm:$0xf]
        %v838 = vld [vmem:[%s4 + $0x4] sm:$0xf]
        %v839 = vld [vmem:[%s4 + $0x8] sm:$0xf]
        %v840 = vld [vmem:[%s4 + $0xc] sm:$0xf]
        %v841 = vld [vmem:[%s4 + $0x10] sm:$0x3]
        %v842 = vld [vmem:[%s5] sm:$0x1]
        %vm859 = vcmask 1046528
        %v860 = vrot.slane %v798, 1
        %v861 = vrot.slane %v799, 1
        %v862 = vsel %vm859, %v860, %v861
        %v863 = vrot.slane %v800, 1
        %v864 = vrot.slane %v801, 1
        %v865 = vsel %vm859, %v863, %v864
        %v866 = vrot.slane %v802, 1
        %v867 = vrot.slane %v803, 1
        %v868 = vsel %vm859, %v866, %v867
        %v869 = vrot.slane %v804, 1
        %v870 = vrot.slane %v805, 1
        %v871 = vsel %vm859, %v869, %v870
        %v872 = vrot.slane %v806, 1
        %v873 = vrot.slane %v807, 1
        %v874 = vsel %vm859, %v872, %v873
        %v875 = vrot.slane %v808, 1
        %v876 = vrot.slane %v809, 1
        %v877 = vsel %vm859, %v875, %v876
        %v878 = vrot.slane %v810, 1
        %v879 = vrot.slane %v811, 1
        %v880 = vsel %vm859, %v878, %v879
        %v881 = vrot.slane %v812, 1
        %v882 = vrot.slane %v813, 1
        %v883 = vsel %vm859, %v881, %v882
        %v900 = vrot.slane %v814, 1
        %v901 = vrot.slane %v815, 1
        %v902 = vsel %vm859, %v900, %v901
        %v903 = vrot.slane %v816, 1
        %v904 = vrot.slane %v817, 1
        %v905 = vsel %vm859, %v903, %v904
        %v906 = vrot.slane %v818, 1
        %v907 = vrot.slane %v819, 1
        %v908 = vsel %vm859, %v906, %v907
        %v909 = vrot.slane %v820, 1
        %v910 = vrot.slane %v821, 1
        %v911 = vsel %vm859, %v909, %v910
        %v912 = vrot.slane %v822, 1
        %v913 = vrot.slane %v823, 1
        %v914 = vsel %vm859, %v912, %v913
        %v915 = vrot.slane %v824, 1
        %v916 = vrot.slane %v825, 1
        %v917 = vsel %vm859, %v915, %v916
        %v918 = vrot.slane %v826, 1
        %v919 = vrot.slane %v827, 1
        %v920 = vsel %vm859, %v918, %v919
        %v921 = vrot.slane %v828, 1
        %v922 = vrot.slane %v829, 1
        %v923 = vsel %vm859, %v921, %v922
        %v926 = vrot.slane %v835, 1
        %v927 = vrot.slane %v836, 1
        %v928 = vsel %vm859, %v926, %v927
        %929 = vrot.lane.b32.xlu0 %v862, 8
        %v930 = vpop.permute.xlu0 %929
        %931 = vrot.lane.b32.xlu0 %v865, 8
        %v932 = vpop.permute.xlu0 %931
        %933 = vrot.lane.b32.xlu0 %v868, 8
        %v934 = vpop.permute.xlu0 %933
        %935 = vrot.lane.b32.xlu0 %v871, 8
        %v936 = vpop.permute.xlu0 %935
        %937 = vrot.lane.b32.xlu0 %v874, 8
        %v938 = vpop.permute.xlu0 %937
        %939 = vrot.lane.b32.xlu0 %v877, 8
        %v940 = vpop.permute.xlu0 %939
        %941 = vrot.lane.b32.xlu0 %v880, 8
        %v942 = vpop.permute.xlu0 %941
        %943 = vrot.lane.b32.xlu0 %v883, 8
        %v944 = vpop.permute.xlu0 %943
        %953 = vrot.lane.b32.xlu0 %v814, 12
        %v954 = vpop.permute.xlu0 %953
        %955 = vrot.lane.b32.xlu0 %v816, 12
        %v956 = vpop.permute.xlu0 %955
        %957 = vrot.lane.b32.xlu0 %v818, 12
        %v958 = vpop.permute.xlu0 %957
        %959 = vrot.lane.b32.xlu0 %v820, 12
        %v960 = vpop.permute.xlu0 %959
        %961 = vrot.lane.b32.xlu0 %v822, 12
        %v962 = vpop.permute.xlu0 %961
        %963 = vrot.lane.b32.xlu0 %v824, 12
        %v964 = vpop.permute.xlu0 %963
        %965 = vrot.lane.b32.xlu0 %v826, 12
        %v966 = vpop.permute.xlu0 %965
        %967 = vrot.lane.b32.xlu0 %v828, 12
        %v968 = vpop.permute.xlu0 %967
        %977 = vrot.lane.b32.xlu0 %v902, 20
        %v978 = vpop.permute.xlu0 %977
        %979 = vrot.lane.b32.xlu0 %v905, 20
        %v980 = vpop.permute.xlu0 %979
        %981 = vrot.lane.b32.xlu0 %v908, 20
        %v982 = vpop.permute.xlu0 %981
        %983 = vrot.lane.b32.xlu0 %v911, 20
        %v984 = vpop.permute.xlu0 %983
        %985 = vrot.lane.b32.xlu0 %v914, 20
        %v986 = vpop.permute.xlu0 %985
        %987 = vrot.lane.b32.xlu0 %v917, 20
        %v988 = vpop.permute.xlu0 %987
        %989 = vrot.lane.b32.xlu0 %v920, 20
        %v990 = vpop.permute.xlu0 %989
        %991 = vrot.lane.b32.xlu0 %v923, 20
        %v992 = vpop.permute.xlu0 %991
        %1001 = vrot.lane.b32.xlu0 %v800, 24
        %v1002 = vpop.permute.xlu0 %1001
        %1003 = vrot.lane.b32.xlu0 %v802, 24
        %v1004 = vpop.permute.xlu0 %1003
        %1005 = vrot.lane.b32.xlu0 %v804, 24
        %v1006 = vpop.permute.xlu0 %1005
        %1007 = vrot.lane.b32.xlu0 %v806, 24
        %v1008 = vpop.permute.xlu0 %1007
        %1009 = vrot.lane.b32.xlu0 %v808, 24
        %v1010 = vpop.permute.xlu0 %1009
        %1011 = vrot.lane.b32.xlu0 %v810, 24
        %v1012 = vpop.permute.xlu0 %1011
        %1013 = vrot.lane.b32.xlu0 %v812, 24
        %v1014 = vpop.permute.xlu0 %1013
        %1015 = vrot.lane.b32.xlu0 %v835, 24
        %v1016 = vpop.permute.xlu0 %1015
        %1025 = vrot.lane.b32.xlu0 %v865, 32
        %v1026 = vpop.permute.xlu0 %1025
        %1027 = vrot.lane.b32.xlu0 %v868, 32
        %v1028 = vpop.permute.xlu0 %1027
        %1029 = vrot.lane.b32.xlu0 %v871, 32
        %v1030 = vpop.permute.xlu0 %1029
        %1031 = vrot.lane.b32.xlu0 %v874, 32
        %v1032 = vpop.permute.xlu0 %1031
        %1033 = vrot.lane.b32.xlu0 %v877, 32
        %v1034 = vpop.permute.xlu0 %1033
        %1035 = vrot.lane.b32.xlu0 %v880, 32
        %v1036 = vpop.permute.xlu0 %1035
        %1037 = vrot.lane.b32.xlu0 %v883, 32
        %v1038 = vpop.permute.xlu0 %1037
        %1039 = vrot.lane.b32.xlu0 %v928, 32
        %v1040 = vpop.permute.xlu0 %1039
        %vm1049 = vcmask 64512
        %v1050 = vsel %vm1049, %v798, %v930
        %v1051 = vsel %vm1049, %v800, %v932
        %v1052 = vsel %vm1049, %v802, %v934
        %v1053 = vsel %vm1049, %v804, %v936
        %v1054 = vsel %vm1049, %v806, %v938
        %v1055 = vsel %vm1049, %v808, %v940
        %v1056 = vsel %vm1049, %v810, %v942
        %v1057 = vsel %vm1049, %v812, %v944
        %vm1058 = vcmask 97280
        %v1059 = vsel %vm1058, %v1050, %v954
        %v1060 = vsel %vm1058, %v1051, %v956
        %v1061 = vsel %vm1058, %v1052, %v958
        %v1062 = vsel %vm1058, %v1053, %v960
        %v1063 = vsel %vm1058, %v1054, %v962
        %v1064 = vsel %vm1058, %v1055, %v964
        %v1065 = vsel %vm1058, %v1056, %v966
        %v1066 = vsel %vm1058, %v1057, %v968
        %vm1067 = vcmask 162816
        %v1068 = vsel %vm1067, %v1059, %v978
        %v1069 = vsel %vm1067, %v1060, %v980
        %v1070 = vsel %vm1067, %v1061, %v982
        %v1071 = vsel %vm1067, %v1062, %v984
        %v1072 = vsel %vm1067, %v1063, %v986
        %v1073 = vsel %vm1067, %v1064, %v988
        %v1074 = vsel %vm1067, %v1065, %v990
        %v1075 = vsel %vm1067, %v1066, %v992
        %vm1076 = vcmask 195584
        %v1077 = vsel %vm1076, %v1068, %v1002
        %v1078 = vsel %vm1076, %v1069, %v1004
        %v1079 = vsel %vm1076, %v1070, %v1006
        %v1080 = vsel %vm1076, %v1071, %v1008
        %v1081 = vsel %vm1076, %v1072, %v1010
        %v1082 = vsel %vm1076, %v1073, %v1012
        %v1083 = vsel %vm1076, %v1074, %v1014
        %v1084 = vsel %vm1076, %v1075, %v1016
        %vm1085 = vcmask 261120
        %v1086 = vsel %vm1085, %v1077, %v1026
        %v1087 = vsel %vm1085, %v1078, %v1028
        %v1088 = vsel %vm1085, %v1079, %v1030
        %v1089 = vsel %vm1085, %v1080, %v1032
        %v1090 = vsel %vm1085, %v1081, %v1034
        %v1091 = vsel %vm1085, %v1082, %v1036
        %v1092 = vsel %vm1085, %v1083, %v1038
        %v1093 = vsel %vm1085, %v1084, %v1040
        %v1094 = vpack.c.bf16 %v1087, %v1086
        %v1095 = vpack.c.bf16 %v1089, %v1088
        %v1096 = vpack.c.bf16 %v1091, %v1090
        %v1097 = vpack.c.bf16 %v1093, %v1092
        %v1099 = vlaneseq
        %v1100 = vshrl.u32 %v1099, 7
        %v1101 = vsub.s32 0, %v1100
        %v1102 = vrot.slane %v842, %v1101
        %v1109 = vunpack.c.l.b16 %v837
        %v1110 = vunpack.c.l.b16 %v838
        %v1111 = vunpack.c.l.b16 %v839
        %v1112 = vunpack.c.l.b16 %v840
        %v1113 = vunpack.c.l.b16 %v841
        %v1114 = vpack.c.b16 %v1110, %v1109
        %v1115 = vpack.c.b16 %v1112, %v1111
        %v1116 = vpack.c.b16 %v1113, %v1113
        %vm1119 = vcmask 293888
        %v1121 = vsel %vm1119, %v1094, 0
        %v1124 = vsel %vm1119, %v1095, 0
        %v1127 = vsel %vm1119, %v1096, 0
        %v1130 = vsel %vm1119, %v1097, 0
        %vm1132 = vcmask 1041408
        %v1134 = vsel %vm1132, %v1116, 0
        %1136 = vmatprep.subr.bf16.mxu0 0
        %1137 = vmatpush1.bf16.msra.mxu0 0
        %1138 = vmatprep.subr.bf16.mxu0 0
        %1139 = vmatpush1.bf16.msra.mxu0 0
        %1140 = vmatprep.subr.bf16.mxu0 0
        %1141 = vmatpush1.bf16.msra.mxu0 0
        %1142 = vmatprep.subr.bf16.mxu0 0
        %1143 = vmatpush1.bf16.msra.mxu0 0
        %1144 = vmatprep.subr.bf16.mxu0 0
        %1145 = vmatpush1.bf16.msra.mxu0 0
        %1146 = vmatprep.subr.bf16.mxu0 0
        %1147 = vmatpush1.bf16.msra.mxu0 %v1134
        %1148 = vmatprep.subr.bf16.mxu0 0
        %1149 = vmatpush1.bf16.msra.mxu0 %v1115
        %1150 = vmatprep.subr.bf16.mxu0 0
        %1151 = vmatpush1.bf16.msra.mxu0 %v1114
        %1152 = vmatprep.subr.bf16.mxu0 0
        %1153 = vmatpush2.bf16.msra.mxu0 0
        %1154 = vmatprep.subr.bf16.mxu0 0
        %1155 = vmatpush2.bf16.msra.mxu0 0
        %1156 = vmatprep.subr.bf16.mxu0 0
        %1157 = vmatpush2.bf16.msra.mxu0 0
        %1158 = vmatprep.subr.bf16.mxu0 0
        %1159 = vmatpush2.bf16.msra.mxu0 0
        %1160 = vmatprep.subr.bf16.mxu0 0
        %1161 = vmatpush2.bf16.msra.mxu0 0
        %1162 = vmatprep.subr.bf16.mxu0 0
        %1163 = vmatpush2.bf16.msra.mxu0 0
        %1164 = vmatprep.subr.bf16.mxu0 0
        %1165 = vmatpush2.bf16.msra.mxu0 0
        %1166 = vmatprep.subr.bf16.mxu0 0
        %1167 = vmatpush2.bf16.msra.mxu0 0
        %1168 = vmatprep.mubr.bf16.mxu0 0
        %1169 = vmatmul.mubr.bf16.gmra.mxu0 %v1121
        %v1170 = vpop.f32.mrf.mxu0
        %v1171 = vadd.f32 %v1102, %v1170
        %v1172 = vpop.f32.mrf.mxu0
        %v1173 = vpop.f32.mrf.mxu0
        %v1174 = vadd.f32 %v1102, %v1173
        %v1175 = vpop.f32.mrf.mxu0
        %1176 = vmatprep.mubr.bf16.mxu0 0
        %1177 = vmatmul.mubr.bf16.gmra.mxu0 %v1124
        %v1178 = vpop.f32.mrf.mxu0
        %v1179 = vadd.f32 %v1102, %v1178
        %v1180 = vpop.f32.mrf.mxu0
        %v1181 = vpop.f32.mrf.mxu0
        %v1182 = vadd.f32 %v1102, %v1181
        %v1183 = vpop.f32.mrf.mxu0
        %1184 = vmatprep.mubr.bf16.mxu0 0
        %1185 = vmatmul.mubr.bf16.gmra.mxu0 %v1127
        %v1186 = vpop.f32.mrf.mxu0
        %v1187 = vadd.f32 %v1102, %v1186
        %v1188 = vpop.f32.mrf.mxu0
        %v1189 = vpop.f32.mrf.mxu0
        %v1190 = vadd.f32 %v1102, %v1189
        %v1191 = vpop.f32.mrf.mxu0
        %1192 = vmatprep.mubr.bf16.mxu0 0
        %1193 = vmatmul.mubr.bf16.gmra.mxu0 %v1130
        %v1194 = vpop.f32.mrf.mxu0
        %v1195 = vadd.f32 %v1102, %v1194
        %v1196 = vpop.f32.mrf.mxu0
        %v1197 = vpop.f32.mrf.mxu0
        %v1198 = vadd.f32 %v1102, %v1197
        %v1199 = vpop.f32.mrf.mxu0
        %1200 = vdwg.mxu0
        %1201 = vst.msk [vmem:[%s572] sm:$0xff] %vm1049, %v1171
        %1202 = vst.msk [vmem:[%s572 + $0x8] sm:$0xff] %vm1049, %v1174
        %1203 = vst.msk [vmem:[%s572 + $0x10] sm:$0xff] %vm1049, %v1179
        %1204 = vst.msk [vmem:[%s572 + $0x18] sm:$0xff] %vm1049, %v1182
        %1205 = vst.msk [vmem:[%s572 + $0x20] sm:$0xff] %vm1049, %v1187
        %1206 = vst.msk [vmem:[%s572 + $0x28] sm:$0xff] %vm1049, %v1190
        %1207 = vst.msk [vmem:[%s572 + $0x30] sm:$0xff] %vm1049, %v1195
        %1208 = vst.msk [vmem:[%s572 + $0x38] sm:$0xff] %vm1049, %v1198
        %s1209 = smul.u32 8, %s22
        %p1210 = scmp.lt.s32.totalorder %s21, 1
        %s1211 = scalar_select %p1210, %s21, 1
        %p1212 = scmp.lt.s32.totalorder %s1209, 7
        %s1213 = scalar_select %p1212, %s1209, 7
        %s1214 = smul.addr %s1211, 8
        %s1215 = sadd.s32 %s1213, %s1214
        %s1216 = smul.addr %s1215, 8
        %s1217 = scalar_lea.vmem %s6, %s1216
        // Predicated region
        $region97: #{downsampling_module.3} parent=91 // pred_check
          %p1218 = pneg %p193
        $region98: #{downsampling_module.3} parent=91 // pred_check_branch
          %1220 = sbr.rel (%p1218) target = $region100
        $region99: #{downsampling_module.3} parent=91 // pred_region
          %s1221 = smul.u32 8, %s22
        $region100: #{downsampling_module.3} parent=91 // pred_fallthru
          _
      $region92: #{downsampling_module.3} parent=5 // pred_fallthru
        _
      %p1222 = scmp.le.s32.totalorder 2, %s12
      // Predicated region
      $region101: #{downsampling_module.3} parent=5 // pred_check
        %p1223 = pneg %p1222
      $region102: #{downsampling_module.3} parent=5 // pred_check_branch
        %1225 = sbr.rel (%p1223) target = $region104
      $region103: #{downsampling_module.3} parent=5 // pred_region
        %s1226 = ssub.s32 %s12, 2
        // Predicated region
        $region105: #{downsampling_module.3} parent=103 // pred_check
          %p1227 = pneg %p199
        $region106: #{downsampling_module.3} parent=103 // pred_check_branch
          %1229 = sbr.rel (%p1227) target = $region108
        $region107: #{downsampling_module.3} parent=103 // pred_region
          %s1230 = smul.u32 8, %s24
          %p1231 = scmp.lt.s32.totalorder %s23, 1
          %s1232 = scalar_select %p1231, %s23, 1
          %p1233 = scmp.lt.s32.totalorder %s1230, 7
          %s1234 = scalar_select %p1233, %s1230, 7
          %s1235 = smul.addr %s1232, 8
          %s1236 = sadd.s32 %s1234, %s1235
          %s1237 = smul.addr %s1236, 8
          %s1238 = scalar_lea.vmem %s6, %s1237
        $region108: #{downsampling_module.3} parent=103 // pred_fallthru
          _
      $region104: #{downsampling_module.3} parent=5 // pred_fallthru
        _
    $region6: #{downsampling_module.3} parent=1 // loop_footer
      %s16 = sadd.s32 1, %s12
    $region7: #{downsampling_module.3} parent=1 // loop_footer_branch
      %11 = sbr.rel target = $region3
    $region8: #{downsampling_module.3} parent=1 // loop_exit
      _

</llo_original>
